<compile_context>
chip_gen: v5e
topology: v5e:2x2
jax: 0.10.0
libtpu: 0.0.40
codegen_flags: <defaults>
</compile_context>

<pallas_src>
import functools

import jax
import jax.numpy as jnp
from jax.experimental import pallas as pl
from jax.experimental.pallas import tpu as pltpu


def stock_lstm_kernel(xproj0_ref, wrec_ref, b1_ref, h_out_ref, *, seq_len, hidden):
    """2-layer LSTM recurrence over the whole sequence in one invocation.

    xproj0_ref: (T, B, 4H)  pre-projected layer-0 inputs: x_t @ W_ih_l0^T + b0
                            (g-gate columns pre-scaled by 2, see pack_params)
    wrec_ref  : (3H, 4H)    packed [W_hh_l0^T ; W_ih_l1^T ; W_hh_l1^T]
                            (g-gate columns pre-scaled by 2)
    b1_ref    : (1, 4H)     b_ih_l1 + b_hh_l1 (g-gate columns pre-scaled by 2)
    h_out_ref : (B, H)      final top-layer hidden state (h_n[-1])
    """
    H = hidden
    B = xproj0_ref.shape[1]

    # Weights loaded once (~13 vregs at H=32; fine for T=8 full unroll).
    # TODO(synk): for much larger T/H keep these as per-step VMEM reads instead
    # (vld slots are off the EUP/MXU critical path) to avoid vreg spills.
    wrec = wrec_ref[...]
    whh0 = wrec[0 * H:1 * H, :]                      # (H, 4H)
    wih1 = wrec[1 * H:2 * H, :]                      # (H, 4H)
    whh1 = wrec[2 * H:3 * H, :]                      # (H, 4H)
    # Bias broadcast hoisted out of the unrolled loop (JAX does not CSE
    # broadcast_in_dim; inside the unrolled body it would be re-emitted T times).
    b1 = jnp.broadcast_to(b1_ref[...], (B, 4 * H))

    def activate(gates):
        # Single EUP pass: with the g-gate pre-activations pre-scaled by 2,
        #   t = tanh(gates/2)   gives   tanh(pre_g)          in the g block and
        #   sigmoid(pre) = 0.5*t + 0.5  in the i/f/o blocks. (PyTorch order i,f,g,o.)
        t = jnp.tanh(0.5 * gates)
        sg = 0.5 * t + 0.5
        i = sg[:, 0 * H:1 * H]
        f = sg[:, 1 * H:2 * H]
        g = t[:, 2 * H:3 * H]
        o = sg[:, 3 * H:4 * H]
        return i, f, g, o

    def step(t_idx, carry):
        h0, c0, h1, c1 = carry

        # Recurrent projections depend only on t-1 state -> off the critical
        # path; they can overlap with the activations of the previous step.
        rec0 = jnp.dot(h0, whh0, preferred_element_type=jnp.float32)
        rec1 = jnp.dot(h1, whh1, preferred_element_type=jnp.float32) + b1

        # ---- layer 0 ----  (input projection + bias precomputed in wrapper)
        gates0 = xproj0_ref[t_idx] + rec0
        i0, f0, g0, o0 = activate(gates0)
        c0 = f0 * c0 + i0 * g0
        h0 = o0 * jnp.tanh(c0)

        # ---- layer 1 ----  (only the h0_t @ W_ih_l1 dot sits on the chain)
        gates1 = jnp.dot(h0, wih1, preferred_element_type=jnp.float32) + rec1
        i1, f1, g1, o1 = activate(gates1)
        c1 = f1 * c1 + i1 * g1
        h1 = o1 * jnp.tanh(c1)

        return h0, c0, h1, c1

    z = jnp.zeros((B, H), jnp.float32)
    # T=8: full unroll gives the LLO scheduler full visibility.
    # TODO(synk): for long sequences use unroll=4..8 and stream xproj0 from
    # pl.ANY with a manual double buffer instead of holding it all in VMEM.
    _, _, h1_final, _ = jax.lax.fori_loop(0, seq_len, step, (z, z, z, z),
                                          unroll=True)
    h_out_ref[...] = h1_final


def stock_lstm_forward(x, kparams, hidden):
    """x: (B, T, F) float32 (batch_first, as in nn.LSTM(batch_first=True)).
    Returns (B, 2) softmax probabilities (StockLSTM.forward semantics)."""
    B, T, F = x.shape
    H = hidden

    # Hoisted layer-0 input projection: one well-shaped (T*B, F)@(F, 4H) matmul
    # that also folds the batch-first -> time-major transpose and the layer-0
    # bias. Removes a concat + K=F matmul work from every serial step.
    xproj0 = jnp.einsum("btf,fg->tbg", x, kparams["wih0"]) + kparams["b0"]

    vmem = pl.BlockSpec(memory_space=pltpu.MemorySpace.VMEM)
    kernel = functools.partial(stock_lstm_kernel, seq_len=T, hidden=H)

    h_last = pl.pallas_call(
        kernel,
        out_shape=jax.ShapeDtypeStruct((B, H), jnp.float32),
        in_specs=[vmem, vmem, vmem],
        out_specs=vmem,
        # TODO(synk): for throughput on v7x (2 TCs), add grid=(2,) sharding the
        # batch with dimension_semantics=("parallel",).
    )(xproj0, kparams["wrec"], kparams["b1"])

    # Lane-sparse Linear(H,2) + Softmax head hoisted out of the kernel
    # (runs once per call; avoids masked (B,2) stores in-kernel).
    logits = h_last @ kparams["wlin"] + kparams["blin"]
    return jax.nn.softmax(logits, axis=1)


def init_params(key, n_features, hidden_size):
    """PyTorch-layout parameters, U(-1/sqrt(H), 1/sqrt(H)) like nn.LSTM/nn.Linear."""
    H, F = hidden_size, n_features
    bound = 1.0 / jnp.sqrt(jnp.float32(H))
    ks = jax.random.split(key, 10)
    u = lambda k, shape: jax.random.uniform(k, shape, jnp.float32, -bound, bound)
    return {
        "w_ih_l0": u(ks[0], (4 * H, F)),
        "w_hh_l0": u(ks[1], (4 * H, H)),
        "b_ih_l0": u(ks[2], (4 * H,)),
        "b_hh_l0": u(ks[3], (4 * H,)),
        "w_ih_l1": u(ks[4], (4 * H, H)),
        "w_hh_l1": u(ks[5], (4 * H, H)),
        "b_ih_l1": u(ks[6], (4 * H,)),
        "b_hh_l1": u(ks[7], (4 * H,)),
        "w_lin": u(ks[8], (2, H)),
        "b_lin": u(ks[9], (2,)),
    }


def pack_params(p, n_features, hidden_size):
    """Kernel layout: transposed, packed, and with the g-gate columns pre-scaled
    by 2 so the kernel needs only a single tanh pass per gate vector."""
    H = hidden_size

    def scale_g(m_t):  # m_t: (..., 4H); scale the g block (PyTorch order i,f,g,o)
        return m_t.at[..., 2 * H:3 * H].multiply(2.0)

    wih0 = scale_g(p["w_ih_l0"].T)                                    # (F, 4H)
    b0 = scale_g((p["b_ih_l0"] + p["b_hh_l0"])[None, :])              # (1, 4H)
    wrec = scale_g(jnp.concatenate(
        [p["w_hh_l0"].T, p["w_ih_l1"].T, p["w_hh_l1"].T], axis=0))    # (3H, 4H)
    b1 = scale_g((p["b_ih_l1"] + p["b_hh_l1"])[None, :])              # (1, 4H)
    return {
        "wih0": wih0,
        "b0": b0,
        "wrec": wrec,
        "b1": b1,
        "wlin": p["w_lin"].T,                                         # (H, 2)
        "blin": p["b_lin"][None, :],                                  # (1, 2)
    }


def reference_forward(x, p, hidden):
    """Pure-JAX reference of StockLSTM.forward (PyTorch semantics), computed
    directly from the un-packed, un-scaled PyTorch-layout parameters so it
    independently validates the kernel's packing, hoisted projection and
    tanh-based activation trick."""
    B, T, F = x.shape
    H = hidden

    def cell(x_in, h, c, wih, whh, bih, bhh):
        gates = x_in @ wih.T + h @ whh.T + bih + bhh
        i = jax.nn.sigmoid(gates[:, 0 * H:1 * H])
        f = jax.nn.sigmoid(gates[:, 1 * H:2 * H])
        g = jnp.tanh(gates[:, 2 * H:3 * H])
        o = jax.nn.sigmoid(gates[:, 3 * H:4 * H])
        c = f * c + i * g
        h = o * jnp.tanh(c)
        return h, c

    h0 = c0 = h1 = c1 = jnp.zeros((B, H), jnp.float32)
    for t in range(T):
        h0, c0 = cell(x[:, t, :], h0, c0, p["w_ih_l0"], p["w_hh_l0"],
                      p["b_ih_l0"], p["b_hh_l0"])
        h1, c1 = cell(h0, h1, c1, p["w_ih_l1"], p["w_hh_l1"],
                      p["b_ih_l1"], p["b_hh_l1"])
    logits = h1 @ p["w_lin"].T + p["b_lin"]
    return jax.nn.softmax(logits, axis=1)


if __name__ == "__main__":
    B, T, F, H = 8, 8, 8, 32  # batch, seq_len, n_features, hidden_size

    key = jax.random.PRNGKey(0)
    k_x, k_p = jax.random.split(key)
    x = jax.random.normal(k_x, (B, T, F), dtype=jnp.float32)
    torch_params = init_params(k_p, n_features=F, hidden_size=H)
    kparams = pack_params(torch_params, n_features=F, hidden_size=H)

    probs = stock_lstm_forward(x, kparams, hidden=H)
    probs = jax.block_until_ready(probs)

    ref = reference_forward(x, torch_params, hidden=H)
    assert probs.shape == (B, 2)
    assert jnp.allclose(jnp.sum(probs, axis=1), 1.0, atol=1e-5)
    # Slightly loosened vs 1e-5: the sigmoid-via-tanh identity and split-dot
    # summation order change results by a few ulp.
    assert jnp.allclose(probs, ref, atol=2e-5, rtol=2e-5), (probs, ref)

    print("KERNEL_OK")
</pallas_src>

<mosaic_0001>
module attributes {stable_mosaic.version = 11 : i64} {
  func.func @stock_lstm_kernel(%arg0: memref<8x8x128xf32, #tpu.memory_space<vmem>>, %arg1: memref<96x128xf32, #tpu.memory_space<vmem>>, %arg2: memref<1x128xf32, #tpu.memory_space<vmem>>, %arg3: memref<8x32xf32, #tpu.memory_space<vmem>>) attributes {dimension_semantics = [], scalar_prefetch = 0 : i64, scratch_operands = 0 : i64, tpu.core_type = #tpu.core_type<tc>} {
    %c0 = arith.constant 0 : index
    %c0_0 = arith.constant 0 : index
    %0 = vector.load %arg1[%c0, %c0_0] : memref<96x128xf32, #tpu.memory_space<vmem>>, vector<96x128xf32>
    %1 = vector.extract_strided_slice %0 {offsets = [0, 0], sizes = [32, 128], strides = [1, 1]} : vector<96x128xf32> to vector<32x128xf32>
    %2 = vector.extract_strided_slice %0 {offsets = [32, 0], sizes = [32, 128], strides = [1, 1]} : vector<96x128xf32> to vector<32x128xf32>
    %3 = vector.extract_strided_slice %0 {offsets = [64, 0], sizes = [32, 128], strides = [1, 1]} : vector<96x128xf32> to vector<32x128xf32>
    %c0_1 = arith.constant 0 : index
    %c0_2 = arith.constant 0 : index
    %4 = vector.load %arg2[%c0_1, %c0_2] : memref<1x128xf32, #tpu.memory_space<vmem>>, vector<1x128xf32>
    %5 = vector.shape_cast %4 : vector<1x128xf32> to vector<1x128xf32>
    %6 = vector.broadcast %5 : vector<1x128xf32> to vector<8x128xf32>
    %cst = arith.constant 0.000000e+00 : f32
    %7 = vector.broadcast %cst : f32 to vector<8x32xf32>
    %c0_i32 = arith.constant 0 : i32
    %cst_3 = arith.constant dense<0.000000e+00> : vector<8x128xf32>
    %8 = tpu.matmul %7, %1, %cst_3 {dimension_numbers = #tpu.dot_dimension_numbers<[1], [0], [0], [1], [0, 0, 1, 1], [], []>} : vector<8x32xf32>, vector<32x128xf32>, vector<8x128xf32> -> vector<8x128xf32>
    %cst_4 = arith.constant dense<0.000000e+00> : vector<8x128xf32>
    %9 = tpu.matmul %7, %3, %cst_4 {dimension_numbers = #tpu.dot_dimension_numbers<[1], [0], [0], [1], [0, 0, 1, 1], [], []>} : vector<8x32xf32>, vector<32x128xf32>, vector<8x128xf32> -> vector<8x128xf32>
    %10 = arith.addf %9, %6 : vector<8x128xf32>
    %11 = arith.index_cast %c0_i32 : i32 to index
    %c0_5 = arith.constant 0 : index
    %c0_6 = arith.constant 0 : index
    %12 = vector.load %arg0[%11, %c0_5, %c0_6] : memref<8x8x128xf32, #tpu.memory_space<vmem>>, vector<1x8x128xf32>
    %13 = vector.shape_cast %12 : vector<1x8x128xf32> to vector<8x128xf32>
    %14 = arith.addf %13, %8 : vector<8x128xf32>
    %cst_7 = arith.constant 5.000000e-01 : f32
    %15 = vector.broadcast %cst_7 : f32 to vector<8x128xf32>
    %16 = arith.mulf %15, %14 : vector<8x128xf32>
    %17 = math.tanh %16 : vector<8x128xf32>
    %cst_8 = arith.constant 5.000000e-01 : f32
    %18 = vector.broadcast %cst_8 : f32 to vector<8x128xf32>
    %19 = arith.mulf %18, %17 : vector<8x128xf32>
    %cst_9 = arith.constant 5.000000e-01 : f32
    %20 = vector.broadcast %cst_9 : f32 to vector<8x128xf32>
    %21 = arith.addf %19, %20 : vector<8x128xf32>
    %22 = vector.extract_strided_slice %21 {offsets = [0, 0], sizes = [8, 32], strides = [1, 1]} : vector<8x128xf32> to vector<8x32xf32>
    %23 = vector.extract_strided_slice %21 {offsets = [0, 32], sizes = [8, 32], strides = [1, 1]} : vector<8x128xf32> to vector<8x32xf32>
    %24 = vector.extract_strided_slice %17 {offsets = [0, 64], sizes = [8, 32], strides = [1, 1]} : vector<8x128xf32> to vector<8x32xf32>
    %25 = vector.extract_strided_slice %21 {offsets = [0, 96], sizes = [8, 32], strides = [1, 1]} : vector<8x128xf32> to vector<8x32xf32>
    %26 = arith.mulf %23, %7 : vector<8x32xf32>
    %27 = arith.mulf %22, %24 : vector<8x32xf32>
    %28 = arith.addf %26, %27 : vector<8x32xf32>
    %29 = math.tanh %28 : vector<8x32xf32>
    %30 = arith.mulf %25, %29 : vector<8x32xf32>
    %cst_10 = arith.constant dense<0.000000e+00> : vector<8x128xf32>
    %31 = tpu.matmul %30, %2, %cst_10 {dimension_numbers = #tpu.dot_dimension_numbers<[1], [0], [0], [1], [0, 0, 1, 1], [], []>} : vector<8x32xf32>, vector<32x128xf32>, vector<8x128xf32> -> vector<8x128xf32>
    %32 = arith.addf %31, %10 : vector<8x128xf32>
    %cst_11 = arith.constant 5.000000e-01 : f32
    %33 = vector.broadcast %cst_11 : f32 to vector<8x128xf32>
    %34 = arith.mulf %33, %32 : vector<8x128xf32>
    %35 = math.tanh %34 : vector<8x128xf32>
    %cst_12 = arith.constant 5.000000e-01 : f32
    %36 = vector.broadcast %cst_12 : f32 to vector<8x128xf32>
    %37 = arith.mulf %36, %35 : vector<8x128xf32>
    %cst_13 = arith.constant 5.000000e-01 : f32
    %38 = vector.broadcast %cst_13 : f32 to vector<8x128xf32>
    %39 = arith.addf %37, %38 : vector<8x128xf32>
    %40 = vector.extract_strided_slice %39 {offsets = [0, 0], sizes = [8, 32], strides = [1, 1]} : vector<8x128xf32> to vector<8x32xf32>
    %41 = vector.extract_strided_slice %39 {offsets = [0, 32], sizes = [8, 32], strides = [1, 1]} : vector<8x128xf32> to vector<8x32xf32>
    %42 = vector.extract_strided_slice %35 {offsets = [0, 64], sizes = [8, 32], strides = [1, 1]} : vector<8x128xf32> to vector<8x32xf32>
    %43 = vector.extract_strided_slice %39 {offsets = [0, 96], sizes = [8, 32], strides = [1, 1]} : vector<8x128xf32> to vector<8x32xf32>
    %44 = arith.mulf %41, %7 : vector<8x32xf32>
    %45 = arith.mulf %40, %42 : vector<8x32xf32>
    %46 = arith.addf %44, %45 : vector<8x32xf32>
    %47 = math.tanh %46 : vector<8x32xf32>
    %48 = arith.mulf %43, %47 : vector<8x32xf32>
    %c1_i32 = arith.constant 1 : i32
    %cst_14 = arith.constant dense<0.000000e+00> : vector<8x128xf32>
    %49 = tpu.matmul %30, %1, %cst_14 {dimension_numbers = #tpu.dot_dimension_numbers<[1], [0], [0], [1], [0, 0, 1, 1], [], []>} : vector<8x32xf32>, vector<32x128xf32>, vector<8x128xf32> -> vector<8x128xf32>
    %cst_15 = arith.constant dense<0.000000e+00> : vector<8x128xf32>
    %50 = tpu.matmul %48, %3, %cst_15 {dimension_numbers = #tpu.dot_dimension_numbers<[1], [0], [0], [1], [0, 0, 1, 1], [], []>} : vector<8x32xf32>, vector<32x128xf32>, vector<8x128xf32> -> vector<8x128xf32>
    %51 = arith.addf %50, %6 : vector<8x128xf32>
    %52 = arith.index_cast %c1_i32 : i32 to index
    %c0_16 = arith.constant 0 : index
    %c0_17 = arith.constant 0 : index
    %53 = vector.load %arg0[%52, %c0_16, %c0_17] : memref<8x8x128xf32, #tpu.memory_space<vmem>>, vector<1x8x128xf32>
    %54 = vector.shape_cast %53 : vector<1x8x128xf32> to vector<8x128xf32>
    %55 = arith.addf %54, %49 : vector<8x128xf32>
    %cst_18 = arith.constant 5.000000e-01 : f32
    %56 = vector.broadcast %cst_18 : f32 to vector<8x128xf32>
    %57 = arith.mulf %56, %55 : vector<8x128xf32>
    %58 = math.tanh %57 : vector<8x128xf32>
    %cst_19 = arith.constant 5.000000e-01 : f32
    %59 = vector.broadcast %cst_19 : f32 to vector<8x128xf32>
    %60 = arith.mulf %59, %58 : vector<8x128xf32>
    %cst_20 = arith.constant 5.000000e-01 : f32
    %61 = vector.broadcast %cst_20 : f32 to vector<8x128xf32>
    %62 = arith.addf %60, %61 : vector<8x128xf32>
    %63 = vector.extract_strided_slice %62 {offsets = [0, 0], sizes = [8, 32], strides = [1, 1]} : vector<8x128xf32> to vector<8x32xf32>
    %64 = vector.extract_strided_slice %62 {offsets = [0, 32], sizes = [8, 32], strides = [1, 1]} : vector<8x128xf32> to vector<8x32xf32>
    %65 = vector.extract_strided_slice %58 {offsets = [0, 64], sizes = [8, 32], strides = [1, 1]} : vector<8x128xf32> to vector<8x32xf32>
    %66 = vector.extract_strided_slice %62 {offsets = [0, 96], sizes = [8, 32], strides = [1, 1]} : vector<8x128xf32> to vector<8x32xf32>
    %67 = arith.mulf %64, %28 : vector<8x32xf32>
    %68 = arith.mulf %63, %65 : vector<8x32xf32>
    %69 = arith.addf %67, %68 : vector<8x32xf32>
    %70 = math.tanh %69 : vector<8x32xf32>
    %71 = arith.mulf %66, %70 : vector<8x32xf32>
    %cst_21 = arith.constant dense<0.000000e+00> : vector<8x128xf32>
    %72 = tpu.matmul %71, %2, %cst_21 {dimension_numbers = #tpu.dot_dimension_numbers<[1], [0], [0], [1], [0, 0, 1, 1], [], []>} : vector<8x32xf32>, vector<32x128xf32>, vector<8x128xf32> -> vector<8x128xf32>
    %73 = arith.addf %72, %51 : vector<8x128xf32>
    %cst_22 = arith.constant 5.000000e-01 : f32
    %74 = vector.broadcast %cst_22 : f32 to vector<8x128xf32>
    %75 = arith.mulf %74, %73 : vector<8x128xf32>
    %76 = math.tanh %75 : vector<8x128xf32>
    %cst_23 = arith.constant 5.000000e-01 : f32
    %77 = vector.broadcast %cst_23 : f32 to vector<8x128xf32>
    %78 = arith.mulf %77, %76 : vector<8x128xf32>
    %cst_24 = arith.constant 5.000000e-01 : f32
    %79 = vector.broadcast %cst_24 : f32 to vector<8x128xf32>
    %80 = arith.addf %78, %79 : vector<8x128xf32>
    %81 = vector.extract_strided_slice %80 {offsets = [0, 0], sizes = [8, 32], strides = [1, 1]} : vector<8x128xf32> to vector<8x32xf32>
    %82 = vector.extract_strided_slice %80 {offsets = [0, 32], sizes = [8, 32], strides = [1, 1]} : vector<8x128xf32> to vector<8x32xf32>
    %83 = vector.extract_strided_slice %76 {offsets = [0, 64], sizes = [8, 32], strides = [1, 1]} : vector<8x128xf32> to vector<8x32xf32>
    %84 = vector.extract_strided_slice %80 {offsets = [0, 96], sizes = [8, 32], strides = [1, 1]} : vector<8x128xf32> to vector<8x32xf32>
    %85 = arith.mulf %82, %46 : vector<8x32xf32>
    %86 = arith.mulf %81, %83 : vector<8x32xf32>
    %87 = arith.addf %85, %86 : vector<8x32xf32>
    %88 = math.tanh %87 : vector<8x32xf32>
    %89 = arith.mulf %84, %88 : vector<8x32xf32>
    %c2_i32 = arith.constant 2 : i32
    %cst_25 = arith.constant dense<0.000000e+00> : vector<8x128xf32>
    %90 = tpu.matmul %71, %1, %cst_25 {dimension_numbers = #tpu.dot_dimension_numbers<[1], [0], [0], [1], [0, 0, 1, 1], [], []>} : vector<8x32xf32>, vector<32x128xf32>, vector<8x128xf32> -> vector<8x128xf32>
    %cst_26 = arith.constant dense<0.000000e+00> : vector<8x128xf32>
    %91 = tpu.matmul %89, %3, %cst_26 {dimension_numbers = #tpu.dot_dimension_numbers<[1], [0], [0], [1], [0, 0, 1, 1], [], []>} : vector<8x32xf32>, vector<32x128xf32>, vector<8x128xf32> -> vector<8x128xf32>
    %92 = arith.addf %91, %6 : vector<8x128xf32>
    %93 = arith.index_cast %c2_i32 : i32 to index
    %c0_27 = arith.constant 0 : index
    %c0_28 = arith.constant 0 : index
    %94 = vector.load %arg0[%93, %c0_27, %c0_28] : memref<8x8x128xf32, #tpu.memory_space<vmem>>, vector<1x8x128xf32>
    %95 = vector.shape_cast %94 : vector<1x8x128xf32> to vector<8x128xf32>
    %96 = arith.addf %95, %90 : vector<8x128xf32>
    %cst_29 = arith.constant 5.000000e-01 : f32
    %97 = vector.broadcast %cst_29 : f32 to vector<8x128xf32>
    %98 = arith.mulf %97, %96 : vector<8x128xf32>
    %99 = math.tanh %98 : vector<8x128xf32>
    %cst_30 = arith.constant 5.000000e-01 : f32
    %100 = vector.broadcast %cst_30 : f32 to vector<8x128xf32>
    %101 = arith.mulf %100, %99 : vector<8x128xf32>
    %cst_31 = arith.constant 5.000000e-01 : f32
    %102 = vector.broadcast %cst_31 : f32 to vector<8x128xf32>
    %103 = arith.addf %101, %102 : vector<8x128xf32>
    %104 = vector.extract_strided_slice %103 {offsets = [0, 0], sizes = [8, 32], strides = [1, 1]} : vector<8x128xf32> to vector<8x32xf32>
    %105 = vector.extract_strided_slice %103 {offsets = [0, 32], sizes = [8, 32], strides = [1, 1]} : vector<8x128xf32> to vector<8x32xf32>
    %106 = vector.extract_strided_slice %99 {offsets = [0, 64], sizes = [8, 32], strides = [1, 1]} : vector<8x128xf32> to vector<8x32xf32>
    %107 = vector.extract_strided_slice %103 {offsets = [0, 96], sizes = [8, 32], strides = [1, 1]} : vector<8x128xf32> to vector<8x32xf32>
    %108 = arith.mulf %105, %69 : vector<8x32xf32>
    %109 = arith.mulf %104, %106 : vector<8x32xf32>
    %110 = arith.addf %108, %109 : vector<8x32xf32>
    %111 = math.tanh %110 : vector<8x32xf32>
    %112 = arith.mulf %107, %111 : vector<8x32xf32>
    %cst_32 = arith.constant dense<0.000000e+00> : vector<8x128xf32>
    %113 = tpu.matmul %112, %2, %cst_32 {dimension_numbers = #tpu.dot_dimension_numbers<[1], [0], [0], [1], [0, 0, 1, 1], [], []>} : vector<8x32xf32>, vector<32x128xf32>, vector<8x128xf32> -> vector<8x128xf32>
    %114 = arith.addf %113, %92 : vector<8x128xf32>
    %cst_33 = arith.constant 5.000000e-01 : f32
    %115 = vector.broadcast %cst_33 : f32 to vector<8x128xf32>
    %116 = arith.mulf %115, %114 : vector<8x128xf32>
    %117 = math.tanh %116 : vector<8x128xf32>
    %cst_34 = arith.constant 5.000000e-01 : f32
    %118 = vector.broadcast %cst_34 : f32 to vector<8x128xf32>
    %119 = arith.mulf %118, %117 : vector<8x128xf32>
    %cst_35 = arith.constant 5.000000e-01 : f32
    %120 = vector.broadcast %cst_35 : f32 to vector<8x128xf32>
    %121 = arith.addf %119, %120 : vector<8x128xf32>
    %122 = vector.extract_strided_slice %121 {offsets = [0, 0], sizes = [8, 32], strides = [1, 1]} : vector<8x128xf32> to vector<8x32xf32>
    %123 = vector.extract_strided_slice %121 {offsets = [0, 32], sizes = [8, 32], strides = [1, 1]} : vector<8x128xf32> to vector<8x32xf32>
    %124 = vector.extract_strided_slice %117 {offsets = [0, 64], sizes = [8, 32], strides = [1, 1]} : vector<8x128xf32> to vector<8x32xf32>
    %125 = vector.extract_strided_slice %121 {offsets = [0, 96], sizes = [8, 32], strides = [1, 1]} : vector<8x128xf32> to vector<8x32xf32>
    %126 = arith.mulf %123, %87 : vector<8x32xf32>
    %127 = arith.mulf %122, %124 : vector<8x32xf32>
    %128 = arith.addf %126, %127 : vector<8x32xf32>
    %129 = math.tanh %128 : vector<8x32xf32>
    %130 = arith.mulf %125, %129 : vector<8x32xf32>
    %c3_i32 = arith.constant 3 : i32
    %cst_36 = arith.constant dense<0.000000e+00> : vector<8x128xf32>
    %131 = tpu.matmul %112, %1, %cst_36 {dimension_numbers = #tpu.dot_dimension_numbers<[1], [0], [0], [1], [0, 0, 1, 1], [], []>} : vector<8x32xf32>, vector<32x128xf32>, vector<8x128xf32> -> vector<8x128xf32>
    %cst_37 = arith.constant dense<0.000000e+00> : vector<8x128xf32>
    %132 = tpu.matmul %130, %3, %cst_37 {dimension_numbers = #tpu.dot_dimension_numbers<[1], [0], [0], [1], [0, 0, 1, 1], [], []>} : vector<8x32xf32>, vector<32x128xf32>, vector<8x128xf32> -> vector<8x128xf32>
    %133 = arith.addf %132, %6 : vector<8x128xf32>
    %134 = arith.index_cast %c3_i32 : i32 to index
    %c0_38 = arith.constant 0 : index
    %c0_39 = arith.constant 0 : index
    %135 = vector.load %arg0[%134, %c0_38, %c0_39] : memref<8x8x128xf32, #tpu.memory_space<vmem>>, vector<1x8x128xf32>
    %136 = vector.shape_cast %135 : vector<1x8x128xf32> to vector<8x128xf32>
    %137 = arith.addf %136, %131 : vector<8x128xf32>
    %cst_40 = arith.constant 5.000000e-01 : f32
    %138 = vector.broadcast %cst_40 : f32 to vector<8x128xf32>
    %139 = arith.mulf %138, %137 : vector<8x128xf32>
    %140 = math.tanh %139 : vector<8x128xf32>
    %cst_41 = arith.constant 5.000000e-01 : f32
    %141 = vector.broadcast %cst_41 : f32 to vector<8x128xf32>
    %142 = arith.mulf %141, %140 : vector<8x128xf32>
    %cst_42 = arith.constant 5.000000e-01 : f32
    %143 = vector.broadcast %cst_42 : f32 to vector<8x128xf32>
    %144 = arith.addf %142, %143 : vector<8x128xf32>
    %145 = vector.extract_strided_slice %144 {offsets = [0, 0], sizes = [8, 32], strides = [1, 1]} : vector<8x128xf32> to vector<8x32xf32>
    %146 = vector.extract_strided_slice %144 {offsets = [0, 32], sizes = [8, 32], strides = [1, 1]} : vector<8x128xf32> to vector<8x32xf32>
    %147 = vector.extract_strided_slice %140 {offsets = [0, 64], sizes = [8, 32], strides = [1, 1]} : vector<8x128xf32> to vector<8x32xf32>
    %148 = vector.extract_strided_slice %144 {offsets = [0, 96], sizes = [8, 32], strides = [1, 1]} : vector<8x128xf32> to vector<8x32xf32>
    %149 = arith.mulf %146, %110 : vector<8x32xf32>
    %150 = arith.mulf %145, %147 : vector<8x32xf32>
    %151 = arith.addf %149, %150 : vector<8x32xf32>
    %152 = math.tanh %151 : vector<8x32xf32>
    %153 = arith.mulf %148, %152 : vector<8x32xf32>
    %cst_43 = arith.constant dense<0.000000e+00> : vector<8x128xf32>
    %154 = tpu.matmul %153, %2, %cst_43 {dimension_numbers = #tpu.dot_dimension_numbers<[1], [0], [0], [1], [0, 0, 1, 1], [], []>} : vector<8x32xf32>, vector<32x128xf32>, vector<8x128xf32> -> vector<8x128xf32>
    %155 = arith.addf %154, %133 : vector<8x128xf32>
    %cst_44 = arith.constant 5.000000e-01 : f32
    %156 = vector.broadcast %cst_44 : f32 to vector<8x128xf32>
    %157 = arith.mulf %156, %155 : vector<8x128xf32>
    %158 = math.tanh %157 : vector<8x128xf32>
    %cst_45 = arith.constant 5.000000e-01 : f32
    %159 = vector.broadcast %cst_45 : f32 to vector<8x128xf32>
    %160 = arith.mulf %159, %158 : vector<8x128xf32>
    %cst_46 = arith.constant 5.000000e-01 : f32
    %161 = vector.broadcast %cst_46 : f32 to vector<8x128xf32>
    %162 = arith.addf %160, %161 : vector<8x128xf32>
    %163 = vector.extract_strided_slice %162 {offsets = [0, 0], sizes = [8, 32], strides = [1, 1]} : vector<8x128xf32> to vector<8x32xf32>
    %164 = vector.extract_strided_slice %162 {offsets = [0, 32], sizes = [8, 32], strides = [1, 1]} : vector<8x128xf32> to vector<8x32xf32>
    %165 = vector.extract_strided_slice %158 {offsets = [0, 64], sizes = [8, 32], strides = [1, 1]} : vector<8x128xf32> to vector<8x32xf32>
    %166 = vector.extract_strided_slice %162 {offsets = [0, 96], sizes = [8, 32], strides = [1, 1]} : vector<8x128xf32> to vector<8x32xf32>
    %167 = arith.mulf %164, %128 : vector<8x32xf32>
    %168 = arith.mulf %163, %165 : vector<8x32xf32>
    %169 = arith.addf %167, %168 : vector<8x32xf32>
    %170 = math.tanh %169 : vector<8x32xf32>
    %171 = arith.mulf %166, %170 : vector<8x32xf32>
    %c4_i32 = arith.constant 4 : i32
    %cst_47 = arith.constant dense<0.000000e+00> : vector<8x128xf32>
    %172 = tpu.matmul %153, %1, %cst_47 {dimension_numbers = #tpu.dot_dimension_numbers<[1], [0], [0], [1], [0, 0, 1, 1], [], []>} : vector<8x32xf32>, vector<32x128xf32>, vector<8x128xf32> -> vector<8x128xf32>
    %cst_48 = arith.constant dense<0.000000e+00> : vector<8x128xf32>
    %173 = tpu.matmul %171, %3, %cst_48 {dimension_numbers = #tpu.dot_dimension_numbers<[1], [0], [0], [1], [0, 0, 1, 1], [], []>} : vector<8x32xf32>, vector<32x128xf32>, vector<8x128xf32> -> vector<8x128xf32>
    %174 = arith.addf %173, %6 : vector<8x128xf32>
    %175 = arith.index_cast %c4_i32 : i32 to index
    %c0_49 = arith.constant 0 : index
    %c0_50 = arith.constant 0 : index
    %176 = vector.load %arg0[%175, %c0_49, %c0_50] : memref<8x8x128xf32, #tpu.memory_space<vmem>>, vector<1x8x128xf32>
    %177 = vector.shape_cast %176 : vector<1x8x128xf32> to vector<8x128xf32>
    %178 = arith.addf %177, %172 : vector<8x128xf32>
    %cst_51 = arith.constant 5.000000e-01 : f32
    %179 = vector.broadcast %cst_51 : f32 to vector<8x128xf32>
    %180 = arith.mulf %179, %178 : vector<8x128xf32>
    %181 = math.tanh %180 : vector<8x128xf32>
    %cst_52 = arith.constant 5.000000e-01 : f32
    %182 = vector.broadcast %cst_52 : f32 to vector<8x128xf32>
    %183 = arith.mulf %182, %181 : vector<8x128xf32>
    %cst_53 = arith.constant 5.000000e-01 : f32
    %184 = vector.broadcast %cst_53 : f32 to vector<8x128xf32>
    %185 = arith.addf %183, %184 : vector<8x128xf32>
    %186 = vector.extract_strided_slice %185 {offsets = [0, 0], sizes = [8, 32], strides = [1, 1]} : vector<8x128xf32> to vector<8x32xf32>
    %187 = vector.extract_strided_slice %185 {offsets = [0, 32], sizes = [8, 32], strides = [1, 1]} : vector<8x128xf32> to vector<8x32xf32>
    %188 = vector.extract_strided_slice %181 {offsets = [0, 64], sizes = [8, 32], strides = [1, 1]} : vector<8x128xf32> to vector<8x32xf32>
    %189 = vector.extract_strided_slice %185 {offsets = [0, 96], sizes = [8, 32], strides = [1, 1]} : vector<8x128xf32> to vector<8x32xf32>
    %190 = arith.mulf %187, %151 : vector<8x32xf32>
    %191 = arith.mulf %186, %188 : vector<8x32xf32>
    %192 = arith.addf %190, %191 : vector<8x32xf32>
    %193 = math.tanh %192 : vector<8x32xf32>
    %194 = arith.mulf %189, %193 : vector<8x32xf32>
    %cst_54 = arith.constant dense<0.000000e+00> : vector<8x128xf32>
    %195 = tpu.matmul %194, %2, %cst_54 {dimension_numbers = #tpu.dot_dimension_numbers<[1], [0], [0], [1], [0, 0, 1, 1], [], []>} : vector<8x32xf32>, vector<32x128xf32>, vector<8x128xf32> -> vector<8x128xf32>
    %196 = arith.addf %195, %174 : vector<8x128xf32>
    %cst_55 = arith.constant 5.000000e-01 : f32
    %197 = vector.broadcast %cst_55 : f32 to vector<8x128xf32>
    %198 = arith.mulf %197, %196 : vector<8x128xf32>
    %199 = math.tanh %198 : vector<8x128xf32>
    %cst_56 = arith.constant 5.000000e-01 : f32
    %200 = vector.broadcast %cst_56 : f32 to vector<8x128xf32>
    %201 = arith.mulf %200, %199 : vector<8x128xf32>
    %cst_57 = arith.constant 5.000000e-01 : f32
    %202 = vector.broadcast %cst_57 : f32 to vector<8x128xf32>
    %203 = arith.addf %201, %202 : vector<8x128xf32>
    %204 = vector.extract_strided_slice %203 {offsets = [0, 0], sizes = [8, 32], strides = [1, 1]} : vector<8x128xf32> to vector<8x32xf32>
    %205 = vector.extract_strided_slice %203 {offsets = [0, 32], sizes = [8, 32], strides = [1, 1]} : vector<8x128xf32> to vector<8x32xf32>
    %206 = vector.extract_strided_slice %199 {offsets = [0, 64], sizes = [8, 32], strides = [1, 1]} : vector<8x128xf32> to vector<8x32xf32>
    %207 = vector.extract_strided_slice %203 {offsets = [0, 96], sizes = [8, 32], strides = [1, 1]} : vector<8x128xf32> to vector<8x32xf32>
    %208 = arith.mulf %205, %169 : vector<8x32xf32>
    %209 = arith.mulf %204, %206 : vector<8x32xf32>
    %210 = arith.addf %208, %209 : vector<8x32xf32>
    %211 = math.tanh %210 : vector<8x32xf32>
    %212 = arith.mulf %207, %211 : vector<8x32xf32>
    %c5_i32 = arith.constant 5 : i32
    %cst_58 = arith.constant dense<0.000000e+00> : vector<8x128xf32>
    %213 = tpu.matmul %194, %1, %cst_58 {dimension_numbers = #tpu.dot_dimension_numbers<[1], [0], [0], [1], [0, 0, 1, 1], [], []>} : vector<8x32xf32>, vector<32x128xf32>, vector<8x128xf32> -> vector<8x128xf32>
    %cst_59 = arith.constant dense<0.000000e+00> : vector<8x128xf32>
    %214 = tpu.matmul %212, %3, %cst_59 {dimension_numbers = #tpu.dot_dimension_numbers<[1], [0], [0], [1], [0, 0, 1, 1], [], []>} : vector<8x32xf32>, vector<32x128xf32>, vector<8x128xf32> -> vector<8x128xf32>
    %215 = arith.addf %214, %6 : vector<8x128xf32>
    %216 = arith.index_cast %c5_i32 : i32 to index
    %c0_60 = arith.constant 0 : index
    %c0_61 = arith.constant 0 : index
    %217 = vector.load %arg0[%216, %c0_60, %c0_61] : memref<8x8x128xf32, #tpu.memory_space<vmem>>, vector<1x8x128xf32>
    %218 = vector.shape_cast %217 : vector<1x8x128xf32> to vector<8x128xf32>
    %219 = arith.addf %218, %213 : vector<8x128xf32>
    %cst_62 = arith.constant 5.000000e-01 : f32
    %220 = vector.broadcast %cst_62 : f32 to vector<8x128xf32>
    %221 = arith.mulf %220, %219 : vector<8x128xf32>
    %222 = math.tanh %221 : vector<8x128xf32>
    %cst_63 = arith.constant 5.000000e-01 : f32
    %223 = vector.broadcast %cst_63 : f32 to vector<8x128xf32>
    %224 = arith.mulf %223, %222 : vector<8x128xf32>
    %cst_64 = arith.constant 5.000000e-01 : f32
    %225 = vector.broadcast %cst_64 : f32 to vector<8x128xf32>
    %226 = arith.addf %224, %225 : vector<8x128xf32>
    %227 = vector.extract_strided_slice %226 {offsets = [0, 0], sizes = [8, 32], strides = [1, 1]} : vector<8x128xf32> to vector<8x32xf32>
    %228 = vector.extract_strided_slice %226 {offsets = [0, 32], sizes = [8, 32], strides = [1, 1]} : vector<8x128xf32> to vector<8x32xf32>
    %229 = vector.extract_strided_slice %222 {offsets = [0, 64], sizes = [8, 32], strides = [1, 1]} : vector<8x128xf32> to vector<8x32xf32>
    %230 = vector.extract_strided_slice %226 {offsets = [0, 96], sizes = [8, 32], strides = [1, 1]} : vector<8x128xf32> to vector<8x32xf32>
    %231 = arith.mulf %228, %192 : vector<8x32xf32>
    %232 = arith.mulf %227, %229 : vector<8x32xf32>
    %233 = arith.addf %231, %232 : vector<8x32xf32>
    %234 = math.tanh %233 : vector<8x32xf32>
    %235 = arith.mulf %230, %234 : vector<8x32xf32>
    %cst_65 = arith.constant dense<0.000000e+00> : vector<8x128xf32>
    %236 = tpu.matmul %235, %2, %cst_65 {dimension_numbers = #tpu.dot_dimension_numbers<[1], [0], [0], [1], [0, 0, 1, 1], [], []>} : vector<8x32xf32>, vector<32x128xf32>, vector<8x128xf32> -> vector<8x128xf32>
    %237 = arith.addf %236, %215 : vector<8x128xf32>
    %cst_66 = arith.constant 5.000000e-01 : f32
    %238 = vector.broadcast %cst_66 : f32 to vector<8x128xf32>
    %239 = arith.mulf %238, %237 : vector<8x128xf32>
    %240 = math.tanh %239 : vector<8x128xf32>
    %cst_67 = arith.constant 5.000000e-01 : f32
    %241 = vector.broadcast %cst_67 : f32 to vector<8x128xf32>
    %242 = arith.mulf %241, %240 : vector<8x128xf32>
    %cst_68 = arith.constant 5.000000e-01 : f32
    %243 = vector.broadcast %cst_68 : f32 to vector<8x128xf32>
    %244 = arith.addf %242, %243 : vector<8x128xf32>
    %245 = vector.extract_strided_slice %244 {offsets = [0, 0], sizes = [8, 32], strides = [1, 1]} : vector<8x128xf32> to vector<8x32xf32>
    %246 = vector.extract_strided_slice %244 {offsets = [0, 32], sizes = [8, 32], strides = [1, 1]} : vector<8x128xf32> to vector<8x32xf32>
    %247 = vector.extract_strided_slice %240 {offsets = [0, 64], sizes = [8, 32], strides = [1, 1]} : vector<8x128xf32> to vector<8x32xf32>
    %248 = vector.extract_strided_slice %244 {offsets = [0, 96], sizes = [8, 32], strides = [1, 1]} : vector<8x128xf32> to vector<8x32xf32>
    %249 = arith.mulf %246, %210 : vector<8x32xf32>
    %250 = arith.mulf %245, %247 : vector<8x32xf32>
    %251 = arith.addf %249, %250 : vector<8x32xf32>
    %252 = math.tanh %251 : vector<8x32xf32>
    %253 = arith.mulf %248, %252 : vector<8x32xf32>
    %c6_i32 = arith.constant 6 : i32
    %cst_69 = arith.constant dense<0.000000e+00> : vector<8x128xf32>
    %254 = tpu.matmul %235, %1, %cst_69 {dimension_numbers = #tpu.dot_dimension_numbers<[1], [0], [0], [1], [0, 0, 1, 1], [], []>} : vector<8x32xf32>, vector<32x128xf32>, vector<8x128xf32> -> vector<8x128xf32>
    %cst_70 = arith.constant dense<0.000000e+00> : vector<8x128xf32>
    %255 = tpu.matmul %253, %3, %cst_70 {dimension_numbers = #tpu.dot_dimension_numbers<[1], [0], [0], [1], [0, 0, 1, 1], [], []>} : vector<8x32xf32>, vector<32x128xf32>, vector<8x128xf32> -> vector<8x128xf32>
    %256 = arith.addf %255, %6 : vector<8x128xf32>
    %257 = arith.index_cast %c6_i32 : i32 to index
    %c0_71 = arith.constant 0 : index
    %c0_72 = arith.constant 0 : index
    %258 = vector.load %arg0[%257, %c0_71, %c0_72] : memref<8x8x128xf32, #tpu.memory_space<vmem>>, vector<1x8x128xf32>
    %259 = vector.shape_cast %258 : vector<1x8x128xf32> to vector<8x128xf32>
    %260 = arith.addf %259, %254 : vector<8x128xf32>
    %cst_73 = arith.constant 5.000000e-01 : f32
    %261 = vector.broadcast %cst_73 : f32 to vector<8x128xf32>
    %262 = arith.mulf %261, %260 : vector<8x128xf32>
    %263 = math.tanh %262 : vector<8x128xf32>
    %cst_74 = arith.constant 5.000000e-01 : f32
    %264 = vector.broadcast %cst_74 : f32 to vector<8x128xf32>
    %265 = arith.mulf %264, %263 : vector<8x128xf32>
    %cst_75 = arith.constant 5.000000e-01 : f32
    %266 = vector.broadcast %cst_75 : f32 to vector<8x128xf32>
    %267 = arith.addf %265, %266 : vector<8x128xf32>
    %268 = vector.extract_strided_slice %267 {offsets = [0, 0], sizes = [8, 32], strides = [1, 1]} : vector<8x128xf32> to vector<8x32xf32>
    %269 = vector.extract_strided_slice %267 {offsets = [0, 32], sizes = [8, 32], strides = [1, 1]} : vector<8x128xf32> to vector<8x32xf32>
    %270 = vector.extract_strided_slice %263 {offsets = [0, 64], sizes = [8, 32], strides = [1, 1]} : vector<8x128xf32> to vector<8x32xf32>
    %271 = vector.extract_strided_slice %267 {offsets = [0, 96], sizes = [8, 32], strides = [1, 1]} : vector<8x128xf32> to vector<8x32xf32>
    %272 = arith.mulf %269, %233 : vector<8x32xf32>
    %273 = arith.mulf %268, %270 : vector<8x32xf32>
    %274 = arith.addf %272, %273 : vector<8x32xf32>
    %275 = math.tanh %274 : vector<8x32xf32>
    %276 = arith.mulf %271, %275 : vector<8x32xf32>
    %cst_76 = arith.constant dense<0.000000e+00> : vector<8x128xf32>
    %277 = tpu.matmul %276, %2, %cst_76 {dimension_numbers = #tpu.dot_dimension_numbers<[1], [0], [0], [1], [0, 0, 1, 1], [], []>} : vector<8x32xf32>, vector<32x128xf32>, vector<8x128xf32> -> vector<8x128xf32>
    %278 = arith.addf %277, %256 : vector<8x128xf32>
    %cst_77 = arith.constant 5.000000e-01 : f32
    %279 = vector.broadcast %cst_77 : f32 to vector<8x128xf32>
    %280 = arith.mulf %279, %278 : vector<8x128xf32>
    %281 = math.tanh %280 : vector<8x128xf32>
    %cst_78 = arith.constant 5.000000e-01 : f32
    %282 = vector.broadcast %cst_78 : f32 to vector<8x128xf32>
    %283 = arith.mulf %282, %281 : vector<8x128xf32>
    %cst_79 = arith.constant 5.000000e-01 : f32
    %284 = vector.broadcast %cst_79 : f32 to vector<8x128xf32>
    %285 = arith.addf %283, %284 : vector<8x128xf32>
    %286 = vector.extract_strided_slice %285 {offsets = [0, 0], sizes = [8, 32], strides = [1, 1]} : vector<8x128xf32> to vector<8x32xf32>
    %287 = vector.extract_strided_slice %285 {offsets = [0, 32], sizes = [8, 32], strides = [1, 1]} : vector<8x128xf32> to vector<8x32xf32>
    %288 = vector.extract_strided_slice %281 {offsets = [0, 64], sizes = [8, 32], strides = [1, 1]} : vector<8x128xf32> to vector<8x32xf32>
    %289 = vector.extract_strided_slice %285 {offsets = [0, 96], sizes = [8, 32], strides = [1, 1]} : vector<8x128xf32> to vector<8x32xf32>
    %290 = arith.mulf %287, %251 : vector<8x32xf32>
    %291 = arith.mulf %286, %288 : vector<8x32xf32>
    %292 = arith.addf %290, %291 : vector<8x32xf32>
    %293 = math.tanh %292 : vector<8x32xf32>
    %294 = arith.mulf %289, %293 : vector<8x32xf32>
    %c7_i32 = arith.constant 7 : i32
    %cst_80 = arith.constant dense<0.000000e+00> : vector<8x128xf32>
    %295 = tpu.matmul %276, %1, %cst_80 {dimension_numbers = #tpu.dot_dimension_numbers<[1], [0], [0], [1], [0, 0, 1, 1], [], []>} : vector<8x32xf32>, vector<32x128xf32>, vector<8x128xf32> -> vector<8x128xf32>
    %cst_81 = arith.constant dense<0.000000e+00> : vector<8x128xf32>
    %296 = tpu.matmul %294, %3, %cst_81 {dimension_numbers = #tpu.dot_dimension_numbers<[1], [0], [0], [1], [0, 0, 1, 1], [], []>} : vector<8x32xf32>, vector<32x128xf32>, vector<8x128xf32> -> vector<8x128xf32>
    %297 = arith.addf %296, %6 : vector<8x128xf32>
    %298 = arith.index_cast %c7_i32 : i32 to index
    %c0_82 = arith.constant 0 : index
    %c0_83 = arith.constant 0 : index
    %299 = vector.load %arg0[%298, %c0_82, %c0_83] : memref<8x8x128xf32, #tpu.memory_space<vmem>>, vector<1x8x128xf32>
    %300 = vector.shape_cast %299 : vector<1x8x128xf32> to vector<8x128xf32>
    %301 = arith.addf %300, %295 : vector<8x128xf32>
    %cst_84 = arith.constant 5.000000e-01 : f32
    %302 = vector.broadcast %cst_84 : f32 to vector<8x128xf32>
    %303 = arith.mulf %302, %301 : vector<8x128xf32>
    %304 = math.tanh %303 : vector<8x128xf32>
    %cst_85 = arith.constant 5.000000e-01 : f32
    %305 = vector.broadcast %cst_85 : f32 to vector<8x128xf32>
    %306 = arith.mulf %305, %304 : vector<8x128xf32>
    %cst_86 = arith.constant 5.000000e-01 : f32
    %307 = vector.broadcast %cst_86 : f32 to vector<8x128xf32>
    %308 = arith.addf %306, %307 : vector<8x128xf32>
    %309 = vector.extract_strided_slice %308 {offsets = [0, 0], sizes = [8, 32], strides = [1, 1]} : vector<8x128xf32> to vector<8x32xf32>
    %310 = vector.extract_strided_slice %308 {offsets = [0, 32], sizes = [8, 32], strides = [1, 1]} : vector<8x128xf32> to vector<8x32xf32>
    %311 = vector.extract_strided_slice %304 {offsets = [0, 64], sizes = [8, 32], strides = [1, 1]} : vector<8x128xf32> to vector<8x32xf32>
    %312 = vector.extract_strided_slice %308 {offsets = [0, 96], sizes = [8, 32], strides = [1, 1]} : vector<8x128xf32> to vector<8x32xf32>
    %313 = arith.mulf %310, %274 : vector<8x32xf32>
    %314 = arith.mulf %309, %311 : vector<8x32xf32>
    %315 = arith.addf %313, %314 : vector<8x32xf32>
    %316 = math.tanh %315 : vector<8x32xf32>
    %317 = arith.mulf %312, %316 : vector<8x32xf32>
    %cst_87 = arith.constant dense<0.000000e+00> : vector<8x128xf32>
    %318 = tpu.matmul %317, %2, %cst_87 {dimension_numbers = #tpu.dot_dimension_numbers<[1], [0], [0], [1], [0, 0, 1, 1], [], []>} : vector<8x32xf32>, vector<32x128xf32>, vector<8x128xf32> -> vector<8x128xf32>
    %319 = arith.addf %318, %297 : vector<8x128xf32>
    %cst_88 = arith.constant 5.000000e-01 : f32
    %320 = vector.broadcast %cst_88 : f32 to vector<8x128xf32>
    %321 = arith.mulf %320, %319 : vector<8x128xf32>
    %322 = math.tanh %321 : vector<8x128xf32>
    %cst_89 = arith.constant 5.000000e-01 : f32
    %323 = vector.broadcast %cst_89 : f32 to vector<8x128xf32>
    %324 = arith.mulf %323, %322 : vector<8x128xf32>
    %cst_90 = arith.constant 5.000000e-01 : f32
    %325 = vector.broadcast %cst_90 : f32 to vector<8x128xf32>
    %326 = arith.addf %324, %325 : vector<8x128xf32>
    %327 = vector.extract_strided_slice %326 {offsets = [0, 0], sizes = [8, 32], strides = [1, 1]} : vector<8x128xf32> to vector<8x32xf32>
    %328 = vector.extract_strided_slice %326 {offsets = [0, 32], sizes = [8, 32], strides = [1, 1]} : vector<8x128xf32> to vector<8x32xf32>
    %329 = vector.extract_strided_slice %322 {offsets = [0, 64], sizes = [8, 32], strides = [1, 1]} : vector<8x128xf32> to vector<8x32xf32>
    %330 = vector.extract_strided_slice %326 {offsets = [0, 96], sizes = [8, 32], strides = [1, 1]} : vector<8x128xf32> to vector<8x32xf32>
    %331 = arith.mulf %328, %292 : vector<8x32xf32>
    %332 = arith.mulf %327, %329 : vector<8x32xf32>
    %333 = arith.addf %331, %332 : vector<8x32xf32>
    %334 = math.tanh %333 : vector<8x32xf32>
    %335 = arith.mulf %330, %334 : vector<8x32xf32>
    %c8_i32 = arith.constant 8 : i32
    %c0_91 = arith.constant 0 : index
    %c0_92 = arith.constant 0 : index
    %336 = vector.load %arg3[%c0_91, %c0_92] : memref<8x32xf32, #tpu.memory_space<vmem>>, vector<8x32xf32>
    tpu.vector_store %arg3[%c0_91, %c0_92], %335 {strides = array<i32>} : memref<8x32xf32, #tpu.memory_space<vmem>>, vector<8x32xf32>,
    return
  }
}

</mosaic_0001>

<llo_original>
// kernel: tpu_custom_call.1
$region0: #{tpu_custom_call.1}
  #allocation0 [shape = 'u32[]', space=smem, size = 0x4, offset = 0x4, fixed_abs, tag = 'smem constant byte address 0x4 - core index']
  #allocation1 [shape = 'u32[72,128]{1,0:T(1,128)}', space=vmem, size = 0x9000, scoped, tag = 'internal scratch']
  %s0 = inlined_call_operand.hbm [shape: f32[8,8,128], index: 0, kind: input, shape index: {}]
  %s1 = inlined_call_operand.hbm [shape: f32[96,128], index: 1, kind: input, shape index: {}]
  %s2 = inlined_call_operand.vmem [shape: f32[1,128], index: 2, kind: input, shape index: {}]
  %s3 = inlined_call_operand.hbm [shape: f32[8,32], index: 3, kind: output, shape index: {}]
  %s4 = sld [smem:[#allocation0]]
  $region30: #{tpu_custom_call.1} parent=0
    _
  %s6 = ssub.s32 1, %s4
  %s7 = scalar_select 0, %s6, %s4
  $region1: #{tpu_custom_call.1} parent=0
    #allocation2 [shape = 'u8[32768]{0}', space=vmem, size = 0x8000, scoped, tag = 'input window, operand 0, single buffered']
    #allocation3 [shape = 's32[1]{0}', space=sflag, size = 0x4, scoped, tag = 'scoped memory for tpu_custom_call.1']
    #allocation4 [shape = 's32[1]{0}', space=sflag, size = 0x4, scoped, tag = 'scoped memory for tpu_custom_call.1']
    #allocation5 [shape = 'u8[49152]{0}', space=vmem, size = 0xc000, scoped, tag = 'input window, operand 1, single buffered']
    #allocation6 [shape = 's32[1]{0}', space=sflag, size = 0x4, scoped, tag = 'scoped memory for tpu_custom_call.1']
    #allocation7 [shape = 'u8[4096]{0}', space=vmem, size = 0x1000, scoped, tag = 'output window, operand 0, single buffered']
    %8 = vsyncpa [#allocation3], 0
    %9 = vsyncpa [#allocation6], 0
    %10 = vsyncpa [#allocation4], 0
    // Predicated region
    $region2: #{tpu_custom_call.1} parent=1 // pred_check
      _
    $region3: #{tpu_custom_call.1} parent=1 // pred_check_branch
      %12 = sbr.rel (0) target = $region5
    $region4: #{tpu_custom_call.1} parent=1 // pred_region
      %14 = vsyncadd [#allocation3], 0
      %s15 = sshll.u32 %s0, 4
      %s16 = int_to_ptr.hbm [resolvable:$true] %s15
      %s17 = sshll.u32 [#allocation2], 4
      %s18 = int_to_ptr.vmem [resolvable:$true] %s17
      %23 = dma.hbm_to_vmem [thread:$0]  %s16, 1024, %s18, [#allocation3], 128, 128, 8
    $region5: #{tpu_custom_call.1} parent=1 // pred_fallthru
      _
    // Predicated region
    $region6: #{tpu_custom_call.1} parent=1 // pred_check
      _
    $region7: #{tpu_custom_call.1} parent=1 // pred_check_branch
      %25 = sbr.rel (0) target = $region9
    $region8: #{tpu_custom_call.1} parent=1 // pred_region
      %27 = vsyncadd [#allocation6], 0
      %s28 = sshll.u32 %s1, 4
      %s29 = int_to_ptr.hbm [resolvable:$true] %s28
      %s30 = sshll.u32 [#allocation5], 4
      %s31 = int_to_ptr.vmem [resolvable:$true] %s30
      %36 = dma.hbm_to_vmem [thread:$0]  %s29, 1536, %s31, [#allocation6], 128, 128, 8
    $region9: #{tpu_custom_call.1} parent=1 // pred_fallthru
      _
    // Predicated region
    $region10: #{tpu_custom_call.1} parent=1 // pred_check
      _
    $region11: #{tpu_custom_call.1} parent=1 // pred_check_branch
      %38 = sbr.rel (0) target = $region13
    $region12: #{tpu_custom_call.1} parent=1 // pred_region
      _
    $region13: #{tpu_custom_call.1} parent=1 // pred_fallthru
      _
    // Predicated region
    $region14: #{tpu_custom_call.1} parent=1 // pred_check
      _
    $region15: #{tpu_custom_call.1} parent=1 // pred_check_branch
      %40 = sbr.rel (0) target = $region17
    $region16: #{tpu_custom_call.1} parent=1 // pred_region
      %42 = dma.done [#allocation3], 1024
    $region17: #{tpu_custom_call.1} parent=1 // pred_fallthru
      _
    // Predicated region
    $region18: #{tpu_custom_call.1} parent=1 // pred_check
      _
    $region19: #{tpu_custom_call.1} parent=1 // pred_check_branch
      %44 = sbr.rel (0) target = $region21
    $region20: #{tpu_custom_call.1} parent=1 // pred_region
      %46 = dma.done [#allocation6], 1536
    $region21: #{tpu_custom_call.1} parent=1 // pred_fallthru
      _
    %v47 = vld [vmem:[#allocation5] sm:$0xff]
    %v48 = vld [vmem:[#allocation5 + $0x8] sm:$0xff]
    %v49 = vld [vmem:[#allocation5 + $0x10] sm:$0xff]
    %v50 = vld [vmem:[#allocation5 + $0x18] sm:$0xff]
    %v51 = vld [vmem:[#allocation5 + $0x20] sm:$0xff]
    %v52 = vld [vmem:[#allocation5 + $0x28] sm:$0xff]
    %v53 = vld [vmem:[#allocation5 + $0x30] sm:$0xff]
    %v54 = vld [vmem:[#allocation5 + $0x38] sm:$0xff]
    %v55 = vld [vmem:[#allocation5 + $0x40] sm:$0xff]
    %v56 = vld [vmem:[#allocation5 + $0x48] sm:$0xff]
    %v57 = vld [vmem:[#allocation5 + $0x50] sm:$0xff]
    %v58 = vld [vmem:[#allocation5 + $0x58] sm:$0xff]
    %v59 = vld [vmem:[%s2] sm:$0x1]
    %v61 = vperm.slane %v59, 0
    %vm63 = vcmask 261120
    %v65 = vsel %vm63, 0.0, 0
    %67 = vmatpush.msra.mxu0 0.0
    %68 = vmatpush.msra.mxu0 0.0
    %69 = vmatpush.msra.mxu0 0.0
    %70 = vmatpush.msra.mxu0 0.0
    %71 = vmatpush.msra.mxu0 0.0
    %72 = vmatpush.msra.mxu0 0.0
    %73 = vmatpush.msra.mxu0 0.0
    %74 = vmatpush.msra.mxu0 0.0
    %75 = vmatpush.msra.mxu0 0.0
    %76 = vmatpush.msra.mxu0 0.0
    %77 = vmatpush.msra.mxu0 0.0
    %78 = vmatpush.msra.mxu0 0.0
    %79 = vmatpush.msra.mxu0 %v50
    %80 = vmatpush.msra.mxu0 %v49
    %81 = vmatpush.msra.mxu0 %v48
    %82 = vmatpush.msra.mxu0 %v47
    %83 = vmatmul.f32.gmra.mxu0 %v65
    %v84 = vpop.f32.mrf.mxu0
    %v85 = vadd.f32 0.0, %v84
    %86 = vdwg.mxu0
    %87 = vmatpush.msra.mxu0 0.0
    %88 = vmatpush.msra.mxu0 0.0
    %89 = vmatpush.msra.mxu0 0.0
    %90 = vmatpush.msra.mxu0 0.0
    %91 = vmatpush.msra.mxu0 0.0
    %92 = vmatpush.msra.mxu0 0.0
    %93 = vmatpush.msra.mxu0 0.0
    %94 = vmatpush.msra.mxu0 0.0
    %95 = vmatpush.msra.mxu0 0.0
    %96 = vmatpush.msra.mxu0 0.0
    %97 = vmatpush.msra.mxu0 0.0
    %98 = vmatpush.msra.mxu0 0.0
    %99 = vmatpush.msra.mxu0 %v58
    %100 = vmatpush.msra.mxu0 %v57
    %101 = vmatpush.msra.mxu0 %v56
    %102 = vmatpush.msra.mxu0 %v55
    %103 = vmatmul.f32.gmra.mxu0 %v65
    %v104 = vpop.f32.mrf.mxu0
    %v105 = vadd.f32 %v61, %v104
    %106 = vdwg.mxu0
    %v107 = vld [vmem:[#allocation2] sm:$0xff]
    %v108 = vadd.f32 %v107, %v85
    %v109 = vmul.f32 %v108, 0.5
    %v110 = vtanh.pop %v109
    %v111 = vmul.f32 %v110, 0.5
    %v112 = vadd.f32 %v111, 0.5
    %v113 = vmul.f32 %v112, 0.0
    %115 = vrot.lane.b32.xlu0 %v110, 64
    %v116 = vpop.permute.xlu0 %115
    %v118 = vmul.f32 %v112, %v116
    %120 = vrot.lane.b32.xlu0 %v118, 32
    %v121 = vpop.permute.xlu0 %120
    %v123 = vadd.f32 %v113, %v121
    %v124 = vtanh.pop %v123
    %126 = vrot.lane.b32.xlu0 %v124, 64
    %v127 = vpop.permute.xlu0 %126
    %v129 = vmul.f32 %v112, %v127
    %131 = vrot.lane.b32.xlu0 %v129, 32
    %v132 = vpop.permute.xlu0 %131
    %v133 = vsel %vm63, %v132, 0
    %135 = vmatpush.msra.mxu0 0.0
    %136 = vmatpush.msra.mxu0 0.0
    %137 = vmatpush.msra.mxu0 0.0
    %138 = vmatpush.msra.mxu0 0.0
    %139 = vmatpush.msra.mxu0 0.0
    %140 = vmatpush.msra.mxu0 0.0
    %141 = vmatpush.msra.mxu0 0.0
    %142 = vmatpush.msra.mxu0 0.0
    %143 = vmatpush.msra.mxu0 0.0
    %144 = vmatpush.msra.mxu0 0.0
    %145 = vmatpush.msra.mxu0 0.0
    %146 = vmatpush.msra.mxu0 0.0
    %147 = vmatpush.msra.mxu0 %v54
    %148 = vmatpush.msra.mxu0 %v53
    %149 = vmatpush.msra.mxu0 %v52
    %150 = vmatpush.msra.mxu0 %v51
    %151 = vmatmul.f32.gmra.mxu0 %v133
    %v152 = vpop.f32.mrf.mxu0
    %v153 = vadd.f32 %v105, %v152
    %154 = vdwg.mxu0
    %v155 = vmul.f32 %v153, 0.5
    %v156 = vtanh.pop %v155
    %v157 = vmul.f32 %v156, 0.5
    %v158 = vadd.f32 %v157, 0.5
    %v159 = vmul.f32 %v158, 0.0
    %161 = vrot.lane.b32.xlu0 %v156, 64
    %v162 = vpop.permute.xlu0 %161
    %v164 = vmul.f32 %v158, %v162
    %166 = vrot.lane.b32.xlu0 %v164, 32
    %v167 = vpop.permute.xlu0 %166
    %v169 = vadd.f32 %v159, %v167
    %v170 = vtanh.pop %v169
    %172 = vrot.lane.b32.xlu0 %v170, 64
    %v173 = vpop.permute.xlu0 %172
    %v175 = vmul.f32 %v158, %v173
    %176 = vmatpush.msra.mxu0 0.0
    %177 = vmatpush.msra.mxu0 0.0
    %178 = vmatpush.msra.mxu0 0.0
    %179 = vmatpush.msra.mxu0 0.0
    %180 = vmatpush.msra.mxu0 0.0
    %181 = vmatpush.msra.mxu0 0.0
    %182 = vmatpush.msra.mxu0 0.0
    %183 = vmatpush.msra.mxu0 0.0
    %184 = vmatpush.msra.mxu0 0.0
    %185 = vmatpush.msra.mxu0 0.0
    %186 = vmatpush.msra.mxu0 0.0
    %187 = vmatpush.msra.mxu0 0.0
    %188 = vmatpush.msra.mxu0 %v50
    %189 = vmatpush.msra.mxu0 %v49
    %190 = vmatpush.msra.mxu0 %v48
    %191 = vmatpush.msra.mxu0 %v47
    %192 = vmatmul.f32.gmra.mxu0 %v133
    %v193 = vpop.f32.mrf.mxu0
    %v194 = vadd.f32 0.0, %v193
    %195 = vdwg.mxu0
    %197 = vrot.lane.b32.xlu0 %v175, 32
    %v198 = vpop.permute.xlu0 %197
    %v199 = vsel %vm63, %v198, 0
    %201 = vmatpush.msra.mxu0 0.0
    %202 = vmatpush.msra.mxu0 0.0
    %203 = vmatpush.msra.mxu0 0.0
    %204 = vmatpush.msra.mxu0 0.0
    %205 = vmatpush.msra.mxu0 0.0
    %206 = vmatpush.msra.mxu0 0.0
    %207 = vmatpush.msra.mxu0 0.0
    %208 = vmatpush.msra.mxu0 0.0
    %209 = vmatpush.msra.mxu0 0.0
    %210 = vmatpush.msra.mxu0 0.0
    %211 = vmatpush.msra.mxu0 0.0
    %212 = vmatpush.msra.mxu0 0.0
    %213 = vmatpush.msra.mxu0 %v58
    %214 = vmatpush.msra.mxu0 %v57
    %215 = vmatpush.msra.mxu0 %v56
    %216 = vmatpush.msra.mxu0 %v55
    %217 = vmatmul.f32.gmra.mxu0 %v199
    %v218 = vpop.f32.mrf.mxu0
    %v219 = vadd.f32 %v61, %v218
    %220 = vdwg.mxu0
    %s221 = scalar_lea.vmem [#allocation2], 8
    %v222 = vld [vmem:[%s221] sm:$0xff]
    %v223 = vadd.f32 %v222, %v194
    %v224 = vmul.f32 %v223, 0.5
    %v225 = vtanh.pop %v224
    %v226 = vmul.f32 %v225, 0.5
    %v227 = vadd.f32 %v226, 0.5
    %v228 = vmul.f32 %v227, %v123
    %230 = vrot.lane.b32.xlu0 %v225, 64
    %v231 = vpop.permute.xlu0 %230
    %v233 = vmul.f32 %v227, %v231
    %235 = vrot.lane.b32.xlu0 %v233, 32
    %v236 = vpop.permute.xlu0 %235
    %v238 = vadd.f32 %v228, %v236
    %v239 = vtanh.pop %v238
    %241 = vrot.lane.b32.xlu0 %v239, 64
    %v242 = vpop.permute.xlu0 %241
    %v244 = vmul.f32 %v227, %v242
    %246 = vrot.lane.b32.xlu0 %v244, 32
    %v247 = vpop.permute.xlu0 %246
    %v248 = vsel %vm63, %v247, 0
    %250 = vmatpush.msra.mxu0 0.0
    %251 = vmatpush.msra.mxu0 0.0
    %252 = vmatpush.msra.mxu0 0.0
    %253 = vmatpush.msra.mxu0 0.0
    %254 = vmatpush.msra.mxu0 0.0
    %255 = vmatpush.msra.mxu0 0.0
    %256 = vmatpush.msra.mxu0 0.0
    %257 = vmatpush.msra.mxu0 0.0
    %258 = vmatpush.msra.mxu0 0.0
    %259 = vmatpush.msra.mxu0 0.0
    %260 = vmatpush.msra.mxu0 0.0
    %261 = vmatpush.msra.mxu0 0.0
    %262 = vmatpush.msra.mxu0 %v54
    %263 = vmatpush.msra.mxu0 %v53
    %264 = vmatpush.msra.mxu0 %v52
    %265 = vmatpush.msra.mxu0 %v51
    %266 = vmatmul.f32.gmra.mxu0 %v248
    %v267 = vpop.f32.mrf.mxu0
    %v268 = vadd.f32 %v219, %v267
    %269 = vdwg.mxu0
    %v270 = vmul.f32 %v268, 0.5
    %v271 = vtanh.pop %v270
    %v272 = vmul.f32 %v271, 0.5
    %v273 = vadd.f32 %v272, 0.5
    %v274 = vmul.f32 %v273, %v169
    %276 = vrot.lane.b32.xlu0 %v271, 64
    %v277 = vpop.permute.xlu0 %276
    %v279 = vmul.f32 %v273, %v277
    %281 = vrot.lane.b32.xlu0 %v279, 32
    %v282 = vpop.permute.xlu0 %281
    %v284 = vadd.f32 %v274, %v282
    %v285 = vtanh.pop %v284
    %287 = vrot.lane.b32.xlu0 %v285, 64
    %v288 = vpop.permute.xlu0 %287
    %v290 = vmul.f32 %v273, %v288
    %291 = vmatpush.msra.mxu0 0.0
    %292 = vmatpush.msra.mxu0 0.0
    %293 = vmatpush.msra.mxu0 0.0
    %294 = vmatpush.msra.mxu0 0.0
    %295 = vmatpush.msra.mxu0 0.0
    %296 = vmatpush.msra.mxu0 0.0
    %297 = vmatpush.msra.mxu0 0.0
    %298 = vmatpush.msra.mxu0 0.0
    %299 = vmatpush.msra.mxu0 0.0
    %300 = vmatpush.msra.mxu0 0.0
    %301 = vmatpush.msra.mxu0 0.0
    %302 = vmatpush.msra.mxu0 0.0
    %303 = vmatpush.msra.mxu0 %v50
    %304 = vmatpush.msra.mxu0 %v49
    %305 = vmatpush.msra.mxu0 %v48
    %306 = vmatpush.msra.mxu0 %v47
    %307 = vmatmul.f32.gmra.mxu0 %v248
    %v308 = vpop.f32.mrf.mxu0
    %v309 = vadd.f32 0.0, %v308
    %310 = vdwg.mxu0
    %312 = vrot.lane.b32.xlu0 %v290, 32
    %v313 = vpop.permute.xlu0 %312
    %v314 = vsel %vm63, %v313, 0
    %316 = vmatpush.msra.mxu0 0.0
    %317 = vmatpush.msra.mxu0 0.0
    %318 = vmatpush.msra.mxu0 0.0
    %319 = vmatpush.msra.mxu0 0.0
    %320 = vmatpush.msra.mxu0 0.0
    %321 = vmatpush.msra.mxu0 0.0
    %322 = vmatpush.msra.mxu0 0.0
    %323 = vmatpush.msra.mxu0 0.0
    %324 = vmatpush.msra.mxu0 0.0
    %325 = vmatpush.msra.mxu0 0.0
    %326 = vmatpush.msra.mxu0 0.0
    %327 = vmatpush.msra.mxu0 0.0
    %328 = vmatpush.msra.mxu0 %v58
    %329 = vmatpush.msra.mxu0 %v57
    %330 = vmatpush.msra.mxu0 %v56
    %331 = vmatpush.msra.mxu0 %v55
    %332 = vmatmul.f32.gmra.mxu0 %v314
    %v333 = vpop.f32.mrf.mxu0
    %v334 = vadd.f32 %v61, %v333
    %335 = vdwg.mxu0
    %s336 = scalar_lea.vmem [#allocation2], 16
    %v337 = vld [vmem:[%s336] sm:$0xff]
    %v338 = vadd.f32 %v337, %v309
    %v339 = vmul.f32 %v338, 0.5
    %v340 = vtanh.pop %v339
    %v341 = vmul.f32 %v340, 0.5
    %v342 = vadd.f32 %v341, 0.5
    %v343 = vmul.f32 %v342, %v238
    %345 = vrot.lane.b32.xlu0 %v340, 64
    %v346 = vpop.permute.xlu0 %345
    %v348 = vmul.f32 %v342, %v346
    %350 = vrot.lane.b32.xlu0 %v348, 32
    %v351 = vpop.permute.xlu0 %350
    %v353 = vadd.f32 %v343, %v351
    %v354 = vtanh.pop %v353
    %356 = vrot.lane.b32.xlu0 %v354, 64
    %v357 = vpop.permute.xlu0 %356
    %v359 = vmul.f32 %v342, %v357
    %361 = vrot.lane.b32.xlu0 %v359, 32
    %v362 = vpop.permute.xlu0 %361
    %v363 = vsel %vm63, %v362, 0
    %365 = vmatpush.msra.mxu0 0.0
    %366 = vmatpush.msra.mxu0 0.0
    %367 = vmatpush.msra.mxu0 0.0
    %368 = vmatpush.msra.mxu0 0.0
    %369 = vmatpush.msra.mxu0 0.0
    %370 = vmatpush.msra.mxu0 0.0
    %371 = vmatpush.msra.mxu0 0.0
    %372 = vmatpush.msra.mxu0 0.0
    %373 = vmatpush.msra.mxu0 0.0
    %374 = vmatpush.msra.mxu0 0.0
    %375 = vmatpush.msra.mxu0 0.0
    %376 = vmatpush.msra.mxu0 0.0
    %377 = vmatpush.msra.mxu0 %v54
    %378 = vmatpush.msra.mxu0 %v53
    %379 = vmatpush.msra.mxu0 %v52
    %380 = vmatpush.msra.mxu0 %v51
    %381 = vmatmul.f32.gmra.mxu0 %v363
    %v382 = vpop.f32.mrf.mxu0
    %v383 = vadd.f32 %v334, %v382
    %384 = vdwg.mxu0
    %v385 = vmul.f32 %v383, 0.5
    %v386 = vtanh.pop %v385
    %v387 = vmul.f32 %v386, 0.5
    %v388 = vadd.f32 %v387, 0.5
    %v389 = vmul.f32 %v388, %v284
    %391 = vrot.lane.b32.xlu0 %v386, 64
    %v392 = vpop.permute.xlu0 %391
    %v394 = vmul.f32 %v388, %v392
    %396 = vrot.lane.b32.xlu0 %v394, 32
    %v397 = vpop.permute.xlu0 %396
    %v399 = vadd.f32 %v389, %v397
    %v400 = vtanh.pop %v399
    %402 = vrot.lane.b32.xlu0 %v400, 64
    %v403 = vpop.permute.xlu0 %402
    %v405 = vmul.f32 %v388, %v403
    %406 = vmatpush.msra.mxu0 0.0
    %407 = vmatpush.msra.mxu0 0.0
    %408 = vmatpush.msra.mxu0 0.0
    %409 = vmatpush.msra.mxu0 0.0
    %410 = vmatpush.msra.mxu0 0.0
    %411 = vmatpush.msra.mxu0 0.0
    %412 = vmatpush.msra.mxu0 0.0
    %413 = vmatpush.msra.mxu0 0.0
    %414 = vmatpush.msra.mxu0 0.0
    %415 = vmatpush.msra.mxu0 0.0
    %416 = vmatpush.msra.mxu0 0.0
    %417 = vmatpush.msra.mxu0 0.0
    %418 = vmatpush.msra.mxu0 %v50
    %419 = vmatpush.msra.mxu0 %v49
    %420 = vmatpush.msra.mxu0 %v48
    %421 = vmatpush.msra.mxu0 %v47
    %422 = vmatmul.f32.gmra.mxu0 %v363
    %v423 = vpop.f32.mrf.mxu0
    %v424 = vadd.f32 0.0, %v423
    %425 = vdwg.mxu0
    %427 = vrot.lane.b32.xlu0 %v405, 32
    %v428 = vpop.permute.xlu0 %427
    %v429 = vsel %vm63, %v428, 0
    %431 = vmatpush.msra.mxu0 0.0
    %432 = vmatpush.msra.mxu0 0.0
    %433 = vmatpush.msra.mxu0 0.0
    %434 = vmatpush.msra.mxu0 0.0
    %435 = vmatpush.msra.mxu0 0.0
    %436 = vmatpush.msra.mxu0 0.0
    %437 = vmatpush.msra.mxu0 0.0
    %438 = vmatpush.msra.mxu0 0.0
    %439 = vmatpush.msra.mxu0 0.0
    %440 = vmatpush.msra.mxu0 0.0
    %441 = vmatpush.msra.mxu0 0.0
    %442 = vmatpush.msra.mxu0 0.0
    %443 = vmatpush.msra.mxu0 %v58
    %444 = vmatpush.msra.mxu0 %v57
    %445 = vmatpush.msra.mxu0 %v56
    %446 = vmatpush.msra.mxu0 %v55
    %447 = vmatmul.f32.gmra.mxu0 %v429
    %v448 = vpop.f32.mrf.mxu0
    %v449 = vadd.f32 %v61, %v448
    %450 = vdwg.mxu0
    %s451 = scalar_lea.vmem [#allocation2], 24
    %v452 = vld [vmem:[%s451] sm:$0xff]
    %v453 = vadd.f32 %v452, %v424
    %v454 = vmul.f32 %v453, 0.5
    %v455 = vtanh.pop %v454
    %v456 = vmul.f32 %v455, 0.5
    %v457 = vadd.f32 %v456, 0.5
    %v458 = vmul.f32 %v457, %v353
    %460 = vrot.lane.b32.xlu0 %v455, 64
    %v461 = vpop.permute.xlu0 %460
    %v463 = vmul.f32 %v457, %v461
    %465 = vrot.lane.b32.xlu0 %v463, 32
    %v466 = vpop.permute.xlu0 %465
    %v468 = vadd.f32 %v458, %v466
    %v469 = vtanh.pop %v468
    %471 = vrot.lane.b32.xlu0 %v469, 64
    %v472 = vpop.permute.xlu0 %471
    %v474 = vmul.f32 %v457, %v472
    %476 = vrot.lane.b32.xlu0 %v474, 32
    %v477 = vpop.permute.xlu0 %476
    %v478 = vsel %vm63, %v477, 0
    %480 = vmatpush.msra.mxu0 0.0
    %481 = vmatpush.msra.mxu0 0.0
    %482 = vmatpush.msra.mxu0 0.0
    %483 = vmatpush.msra.mxu0 0.0
    %484 = vmatpush.msra.mxu0 0.0
    %485 = vmatpush.msra.mxu0 0.0
    %486 = vmatpush.msra.mxu0 0.0
    %487 = vmatpush.msra.mxu0 0.0
    %488 = vmatpush.msra.mxu0 0.0
    %489 = vmatpush.msra.mxu0 0.0
    %490 = vmatpush.msra.mxu0 0.0
    %491 = vmatpush.msra.mxu0 0.0
    %492 = vmatpush.msra.mxu0 %v54
    %493 = vmatpush.msra.mxu0 %v53
    %494 = vmatpush.msra.mxu0 %v52
    %495 = vmatpush.msra.mxu0 %v51
    %496 = vmatmul.f32.gmra.mxu0 %v478
    %v497 = vpop.f32.mrf.mxu0
    %v498 = vadd.f32 %v449, %v497
    %499 = vdwg.mxu0
    %v500 = vmul.f32 %v498, 0.5
    %v501 = vtanh.pop %v500
    %v502 = vmul.f32 %v501, 0.5
    %v503 = vadd.f32 %v502, 0.5
    %v504 = vmul.f32 %v503, %v399
    %506 = vrot.lane.b32.xlu0 %v501, 64
    %v507 = vpop.permute.xlu0 %506
    %v509 = vmul.f32 %v503, %v507
    %511 = vrot.lane.b32.xlu0 %v509, 32
    %v512 = vpop.permute.xlu0 %511
    %v514 = vadd.f32 %v504, %v512
    %v515 = vtanh.pop %v514
    %517 = vrot.lane.b32.xlu0 %v515, 64
    %v518 = vpop.permute.xlu0 %517
    %v520 = vmul.f32 %v503, %v518
    %521 = vmatpush.msra.mxu0 0.0
    %522 = vmatpush.msra.mxu0 0.0
    %523 = vmatpush.msra.mxu0 0.0
    %524 = vmatpush.msra.mxu0 0.0
    %525 = vmatpush.msra.mxu0 0.0
    %526 = vmatpush.msra.mxu0 0.0
    %527 = vmatpush.msra.mxu0 0.0
    %528 = vmatpush.msra.mxu0 0.0
    %529 = vmatpush.msra.mxu0 0.0
    %530 = vmatpush.msra.mxu0 0.0
    %531 = vmatpush.msra.mxu0 0.0
    %532 = vmatpush.msra.mxu0 0.0
    %533 = vmatpush.msra.mxu0 %v50
    %534 = vmatpush.msra.mxu0 %v49
    %535 = vmatpush.msra.mxu0 %v48
    %536 = vmatpush.msra.mxu0 %v47
    %537 = vmatmul.f32.gmra.mxu0 %v478
    %v538 = vpop.f32.mrf.mxu0
    %v539 = vadd.f32 0.0, %v538
    %540 = vdwg.mxu0
    %542 = vrot.lane.b32.xlu0 %v520, 32
    %v543 = vpop.permute.xlu0 %542
    %v544 = vsel %vm63, %v543, 0
    %546 = vmatpush.msra.mxu0 0.0
    %547 = vmatpush.msra.mxu0 0.0
    %548 = vmatpush.msra.mxu0 0.0
    %549 = vmatpush.msra.mxu0 0.0
    %550 = vmatpush.msra.mxu0 0.0
    %551 = vmatpush.msra.mxu0 0.0
    %552 = vmatpush.msra.mxu0 0.0
    %553 = vmatpush.msra.mxu0 0.0
    %554 = vmatpush.msra.mxu0 0.0
    %555 = vmatpush.msra.mxu0 0.0
    %556 = vmatpush.msra.mxu0 0.0
    %557 = vmatpush.msra.mxu0 0.0
    %558 = vmatpush.msra.mxu0 %v58
    %559 = vmatpush.msra.mxu0 %v57
    %560 = vmatpush.msra.mxu0 %v56
    %561 = vmatpush.msra.mxu0 %v55
    %562 = vmatmul.f32.gmra.mxu0 %v544
    %v563 = vpop.f32.mrf.mxu0
    %v564 = vadd.f32 %v61, %v563
    %565 = vdwg.mxu0
    %s566 = scalar_lea.vmem [#allocation2], 32
    %v567 = vld [vmem:[%s566] sm:$0xff]
    %v568 = vadd.f32 %v567, %v539
    %v569 = vmul.f32 %v568, 0.5
    %v570 = vtanh.pop %v569
    %v571 = vmul.f32 %v570, 0.5
    %v572 = vadd.f32 %v571, 0.5
    %v573 = vmul.f32 %v572, %v468
    %575 = vrot.lane.b32.xlu0 %v570, 64
    %v576 = vpop.permute.xlu0 %575
    %v578 = vmul.f32 %v572, %v576
    %580 = vrot.lane.b32.xlu0 %v578, 32
    %v581 = vpop.permute.xlu0 %580
    %v583 = vadd.f32 %v573, %v581
    %v584 = vtanh.pop %v583
    %586 = vrot.lane.b32.xlu0 %v584, 64
    %v587 = vpop.permute.xlu0 %586
    %v589 = vmul.f32 %v572, %v587
    %591 = vrot.lane.b32.xlu0 %v589, 32
    %v592 = vpop.permute.xlu0 %591
    %v593 = vsel %vm63, %v592, 0
    %595 = vmatpush.msra.mxu0 0.0
    %596 = vmatpush.msra.mxu0 0.0
    %597 = vmatpush.msra.mxu0 0.0
    %598 = vmatpush.msra.mxu0 0.0
    %599 = vmatpush.msra.mxu0 0.0
    %600 = vmatpush.msra.mxu0 0.0
    %601 = vmatpush.msra.mxu0 0.0
    %602 = vmatpush.msra.mxu0 0.0
    %603 = vmatpush.msra.mxu0 0.0
    %604 = vmatpush.msra.mxu0 0.0
    %605 = vmatpush.msra.mxu0 0.0
    %606 = vmatpush.msra.mxu0 0.0
    %607 = vmatpush.msra.mxu0 %v54
    %608 = vmatpush.msra.mxu0 %v53
    %609 = vmatpush.msra.mxu0 %v52
    %610 = vmatpush.msra.mxu0 %v51
    %611 = vmatmul.f32.gmra.mxu0 %v593
    %v612 = vpop.f32.mrf.mxu0
    %v613 = vadd.f32 %v564, %v612
    %614 = vdwg.mxu0
    %v615 = vmul.f32 %v613, 0.5
    %v616 = vtanh.pop %v615
    %v617 = vmul.f32 %v616, 0.5
    %v618 = vadd.f32 %v617, 0.5
    %v619 = vmul.f32 %v618, %v514
    %621 = vrot.lane.b32.xlu0 %v616, 64
    %v622 = vpop.permute.xlu0 %621
    %v624 = vmul.f32 %v618, %v622
    %626 = vrot.lane.b32.xlu0 %v624, 32
    %v627 = vpop.permute.xlu0 %626
    %v629 = vadd.f32 %v619, %v627
    %v630 = vtanh.pop %v629
    %632 = vrot.lane.b32.xlu0 %v630, 64
    %v633 = vpop.permute.xlu0 %632
    %v635 = vmul.f32 %v618, %v633
    %636 = vmatpush.msra.mxu0 0.0
    %637 = vmatpush.msra.mxu0 0.0
    %638 = vmatpush.msra.mxu0 0.0
    %639 = vmatpush.msra.mxu0 0.0
    %640 = vmatpush.msra.mxu0 0.0
    %641 = vmatpush.msra.mxu0 0.0
    %642 = vmatpush.msra.mxu0 0.0
    %643 = vmatpush.msra.mxu0 0.0
    %644 = vmatpush.msra.mxu0 0.0
    %645 = vmatpush.msra.mxu0 0.0
    %646 = vmatpush.msra.mxu0 0.0
    %647 = vmatpush.msra.mxu0 0.0
    %648 = vmatpush.msra.mxu0 %v50
    %649 = vmatpush.msra.mxu0 %v49
    %650 = vmatpush.msra.mxu0 %v48
    %651 = vmatpush.msra.mxu0 %v47
    %652 = vmatmul.f32.gmra.mxu0 %v593
    %v653 = vpop.f32.mrf.mxu0
    %v654 = vadd.f32 0.0, %v653
    %655 = vdwg.mxu0
    %657 = vrot.lane.b32.xlu0 %v635, 32
    %v658 = vpop.permute.xlu0 %657
    %v659 = vsel %vm63, %v658, 0
    %661 = vmatpush.msra.mxu0 0.0
    %662 = vmatpush.msra.mxu0 0.0
    %663 = vmatpush.msra.mxu0 0.0
    %664 = vmatpush.msra.mxu0 0.0
    %665 = vmatpush.msra.mxu0 0.0
    %666 = vmatpush.msra.mxu0 0.0
    %667 = vmatpush.msra.mxu0 0.0
    %668 = vmatpush.msra.mxu0 0.0
    %669 = vmatpush.msra.mxu0 0.0
    %670 = vmatpush.msra.mxu0 0.0
    %671 = vmatpush.msra.mxu0 0.0
    %672 = vmatpush.msra.mxu0 0.0
    %673 = vmatpush.msra.mxu0 %v58
    %674 = vmatpush.msra.mxu0 %v57
    %675 = vmatpush.msra.mxu0 %v56
    %676 = vmatpush.msra.mxu0 %v55
    %677 = vmatmul.f32.gmra.mxu0 %v659
    %v678 = vpop.f32.mrf.mxu0
    %v679 = vadd.f32 %v61, %v678
    %680 = vdwg.mxu0
    %s681 = scalar_lea.vmem [#allocation2], 40
    %v682 = vld [vmem:[%s681] sm:$0xff]
    %v683 = vadd.f32 %v682, %v654
    %v684 = vmul.f32 %v683, 0.5
    %v685 = vtanh.pop %v684
    %v686 = vmul.f32 %v685, 0.5
    %v687 = vadd.f32 %v686, 0.5
    %v688 = vmul.f32 %v687, %v583
    %690 = vrot.lane.b32.xlu0 %v685, 64
    %v691 = vpop.permute.xlu0 %690
    %v693 = vmul.f32 %v687, %v691
    %695 = vrot.lane.b32.xlu0 %v693, 32
    %v696 = vpop.permute.xlu0 %695
    %v698 = vadd.f32 %v688, %v696
    %v699 = vtanh.pop %v698
    %701 = vrot.lane.b32.xlu0 %v699, 64
    %v702 = vpop.permute.xlu0 %701
    %v704 = vmul.f32 %v687, %v702
    %706 = vrot.lane.b32.xlu0 %v704, 32
    %v707 = vpop.permute.xlu0 %706
    %v708 = vsel %vm63, %v707, 0
    %710 = vmatpush.msra.mxu0 0.0
    %711 = vmatpush.msra.mxu0 0.0
    %712 = vmatpush.msra.mxu0 0.0
    %713 = vmatpush.msra.mxu0 0.0
    %714 = vmatpush.msra.mxu0 0.0
    %715 = vmatpush.msra.mxu0 0.0
    %716 = vmatpush.msra.mxu0 0.0
    %717 = vmatpush.msra.mxu0 0.0
    %718 = vmatpush.msra.mxu0 0.0
    %719 = vmatpush.msra.mxu0 0.0
    %720 = vmatpush.msra.mxu0 0.0
    %721 = vmatpush.msra.mxu0 0.0
    %722 = vmatpush.msra.mxu0 %v54
    %723 = vmatpush.msra.mxu0 %v53
    %724 = vmatpush.msra.mxu0 %v52
    %725 = vmatpush.msra.mxu0 %v51
    %726 = vmatmul.f32.gmra.mxu0 %v708
    %v727 = vpop.f32.mrf.mxu0
    %v728 = vadd.f32 %v679, %v727
    %729 = vdwg.mxu0
    %v730 = vmul.f32 %v728, 0.5
    %v731 = vtanh.pop %v730
    %v732 = vmul.f32 %v731, 0.5
    %v733 = vadd.f32 %v732, 0.5
    %v734 = vmul.f32 %v733, %v629
    %736 = vrot.lane.b32.xlu0 %v731, 64
    %v737 = vpop.permute.xlu0 %736
    %v739 = vmul.f32 %v733, %v737
    %741 = vrot.lane.b32.xlu0 %v739, 32
    %v742 = vpop.permute.xlu0 %741
    %v744 = vadd.f32 %v734, %v742
    %v745 = vtanh.pop %v744
    %747 = vrot.lane.b32.xlu0 %v745, 64
    %v748 = vpop.permute.xlu0 %747
    %v750 = vmul.f32 %v733, %v748
    %751 = vmatpush.msra.mxu0 0.0
    %752 = vmatpush.msra.mxu0 0.0
    %753 = vmatpush.msra.mxu0 0.0
    %754 = vmatpush.msra.mxu0 0.0
    %755 = vmatpush.msra.mxu0 0.0
    %756 = vmatpush.msra.mxu0 0.0
    %757 = vmatpush.msra.mxu0 0.0
    %758 = vmatpush.msra.mxu0 0.0
    %759 = vmatpush.msra.mxu0 0.0
    %760 = vmatpush.msra.mxu0 0.0
    %761 = vmatpush.msra.mxu0 0.0
    %762 = vmatpush.msra.mxu0 0.0
    %763 = vmatpush.msra.mxu0 %v50
    %764 = vmatpush.msra.mxu0 %v49
    %765 = vmatpush.msra.mxu0 %v48
    %766 = vmatpush.msra.mxu0 %v47
    %767 = vmatmul.f32.gmra.mxu0 %v708
    %v768 = vpop.f32.mrf.mxu0
    %v769 = vadd.f32 0.0, %v768
    %770 = vdwg.mxu0
    %772 = vrot.lane.b32.xlu0 %v750, 32
    %v773 = vpop.permute.xlu0 %772
    %v774 = vsel %vm63, %v773, 0
    %776 = vmatpush.msra.mxu0 0.0
    %777 = vmatpush.msra.mxu0 0.0
    %778 = vmatpush.msra.mxu0 0.0
    %779 = vmatpush.msra.mxu0 0.0
    %780 = vmatpush.msra.mxu0 0.0
    %781 = vmatpush.msra.mxu0 0.0
    %782 = vmatpush.msra.mxu0 0.0
    %783 = vmatpush.msra.mxu0 0.0
    %784 = vmatpush.msra.mxu0 0.0
    %785 = vmatpush.msra.mxu0 0.0
    %786 = vmatpush.msra.mxu0 0.0
    %787 = vmatpush.msra.mxu0 0.0
    %788 = vmatpush.msra.mxu0 %v58
    %789 = vmatpush.msra.mxu0 %v57
    %790 = vmatpush.msra.mxu0 %v56
    %791 = vmatpush.msra.mxu0 %v55
    %792 = vmatmul.f32.gmra.mxu0 %v774
    %v793 = vpop.f32.mrf.mxu0
    %v794 = vadd.f32 %v61, %v793
    %795 = vdwg.mxu0
    %s796 = scalar_lea.vmem [#allocation2], 48
    %v797 = vld [vmem:[%s796] sm:$0xff]
    %v798 = vadd.f32 %v797, %v769
    %v799 = vmul.f32 %v798, 0.5
    %v800 = vtanh.pop %v799
    %v801 = vmul.f32 %v800, 0.5
    %v802 = vadd.f32 %v801, 0.5
    %v803 = vmul.f32 %v802, %v698
    %805 = vrot.lane.b32.xlu0 %v800, 64
    %v806 = vpop.permute.xlu0 %805
    %v808 = vmul.f32 %v802, %v806
    %810 = vrot.lane.b32.xlu0 %v808, 32
    %v811 = vpop.permute.xlu0 %810
    %v813 = vadd.f32 %v803, %v811
    %v814 = vtanh.pop %v813
    %816 = vrot.lane.b32.xlu0 %v814, 64
    %v817 = vpop.permute.xlu0 %816
    %v819 = vmul.f32 %v802, %v817
    %821 = vrot.lane.b32.xlu0 %v819, 32
    %v822 = vpop.permute.xlu0 %821
    %v823 = vsel %vm63, %v822, 0
    %825 = vmatpush.msra.mxu0 0.0
    %826 = vmatpush.msra.mxu0 0.0
    %827 = vmatpush.msra.mxu0 0.0
    %828 = vmatpush.msra.mxu0 0.0
    %829 = vmatpush.msra.mxu0 0.0
    %830 = vmatpush.msra.mxu0 0.0
    %831 = vmatpush.msra.mxu0 0.0
    %832 = vmatpush.msra.mxu0 0.0
    %833 = vmatpush.msra.mxu0 0.0
    %834 = vmatpush.msra.mxu0 0.0
    %835 = vmatpush.msra.mxu0 0.0
    %836 = vmatpush.msra.mxu0 0.0
    %837 = vmatpush.msra.mxu0 %v54
    %838 = vmatpush.msra.mxu0 %v53
    %839 = vmatpush.msra.mxu0 %v52
    %840 = vmatpush.msra.mxu0 %v51
    %841 = vmatmul.f32.gmra.mxu0 %v823
    %v842 = vpop.f32.mrf.mxu0
    %v843 = vadd.f32 %v794, %v842
    %844 = vdwg.mxu0
    %v845 = vmul.f32 %v843, 0.5
    %v846 = vtanh.pop %v845
    %v847 = vmul.f32 %v846, 0.5
    %v848 = vadd.f32 %v847, 0.5
    %v849 = vmul.f32 %v848, %v744
    %851 = vrot.lane.b32.xlu0 %v846, 64
    %v852 = vpop.permute.xlu0 %851
    %v854 = vmul.f32 %v848, %v852
    %856 = vrot.lane.b32.xlu0 %v854, 32
    %v857 = vpop.permute.xlu0 %856
    %v859 = vadd.f32 %v849, %v857
    %v860 = vtanh.pop %v859
    %862 = vrot.lane.b32.xlu0 %v860, 64
    %v863 = vpop.permute.xlu0 %862
    %v865 = vmul.f32 %v848, %v863
    %866 = vmatpush.msra.mxu0 0.0
    %867 = vmatpush.msra.mxu0 0.0
    %868 = vmatpush.msra.mxu0 0.0
    %869 = vmatpush.msra.mxu0 0.0
    %870 = vmatpush.msra.mxu0 0.0
    %871 = vmatpush.msra.mxu0 0.0
    %872 = vmatpush.msra.mxu0 0.0
    %873 = vmatpush.msra.mxu0 0.0
    %874 = vmatpush.msra.mxu0 0.0
    %875 = vmatpush.msra.mxu0 0.0
    %876 = vmatpush.msra.mxu0 0.0
    %877 = vmatpush.msra.mxu0 0.0
    %878 = vmatpush.msra.mxu0 %v50
    %879 = vmatpush.msra.mxu0 %v49
    %880 = vmatpush.msra.mxu0 %v48
    %881 = vmatpush.msra.mxu0 %v47
    %882 = vmatmul.f32.gmra.mxu0 %v823
    %v883 = vpop.f32.mrf.mxu0
    %v884 = vadd.f32 0.0, %v883
    %885 = vdwg.mxu0
    %887 = vrot.lane.b32.xlu0 %v865, 32
    %v888 = vpop.permute.xlu0 %887
    %v889 = vsel %vm63, %v888, 0
    %891 = vmatpush.msra.mxu0 0.0
    %892 = vmatpush.msra.mxu0 0.0
    %893 = vmatpush.msra.mxu0 0.0
    %894 = vmatpush.msra.mxu0 0.0
    %895 = vmatpush.msra.mxu0 0.0
    %896 = vmatpush.msra.mxu0 0.0
    %897 = vmatpush.msra.mxu0 0.0
    %898 = vmatpush.msra.mxu0 0.0
    %899 = vmatpush.msra.mxu0 0.0
    %900 = vmatpush.msra.mxu0 0.0
    %901 = vmatpush.msra.mxu0 0.0
    %902 = vmatpush.msra.mxu0 0.0
    %903 = vmatpush.msra.mxu0 %v58
    %904 = vmatpush.msra.mxu0 %v57
    %905 = vmatpush.msra.mxu0 %v56
    %906 = vmatpush.msra.mxu0 %v55
    %907 = vmatmul.f32.gmra.mxu0 %v889
    %v908 = vpop.f32.mrf.mxu0
    %v909 = vadd.f32 %v61, %v908
    %910 = vdwg.mxu0
    %s911 = scalar_lea.vmem [#allocation2], 56
    %v912 = vld [vmem:[%s911] sm:$0xff]
    %v913 = vadd.f32 %v912, %v884
    %v914 = vmul.f32 %v913, 0.5
    %v915 = vtanh.pop %v914
    %v916 = vmul.f32 %v915, 0.5
    %v917 = vadd.f32 %v916, 0.5
    %v918 = vmul.f32 %v917, %v813
    %920 = vrot.lane.b32.xlu0 %v915, 64
    %v921 = vpop.permute.xlu0 %920
    %v923 = vmul.f32 %v917, %v921
    %925 = vrot.lane.b32.xlu0 %v923, 32
    %v926 = vpop.permute.xlu0 %925
    %v928 = vadd.f32 %v918, %v926
    %v929 = vtanh.pop %v928
    %931 = vrot.lane.b32.xlu0 %v929, 64
    %v932 = vpop.permute.xlu0 %931
    %v934 = vmul.f32 %v917, %v932
    %936 = vrot.lane.b32.xlu0 %v934, 32
    %v937 = vpop.permute.xlu0 %936
    %v938 = vsel %vm63, %v937, 0
    %940 = vmatpush.msra.mxu0 0.0
    %941 = vmatpush.msra.mxu0 0.0
    %942 = vmatpush.msra.mxu0 0.0
    %943 = vmatpush.msra.mxu0 0.0
    %944 = vmatpush.msra.mxu0 0.0
    %945 = vmatpush.msra.mxu0 0.0
    %946 = vmatpush.msra.mxu0 0.0
    %947 = vmatpush.msra.mxu0 0.0
    %948 = vmatpush.msra.mxu0 0.0
    %949 = vmatpush.msra.mxu0 0.0
    %950 = vmatpush.msra.mxu0 0.0
    %951 = vmatpush.msra.mxu0 0.0
    %952 = vmatpush.msra.mxu0 %v54
    %953 = vmatpush.msra.mxu0 %v53
    %954 = vmatpush.msra.mxu0 %v52
    %955 = vmatpush.msra.mxu0 %v51
    %956 = vmatmul.f32.gmra.mxu0 %v938
    %v957 = vpop.f32.mrf.mxu0
    %v958 = vadd.f32 %v909, %v957
    %959 = vdwg.mxu0
    %v960 = vmul.f32 %v958, 0.5
    %v961 = vtanh.pop %v960
    %v962 = vmul.f32 %v961, 0.5
    %v963 = vadd.f32 %v962, 0.5
    %v964 = vmul.f32 %v963, %v859
    %966 = vrot.lane.b32.xlu0 %v961, 64
    %v967 = vpop.permute.xlu0 %966
    %v969 = vmul.f32 %v963, %v967
    %971 = vrot.lane.b32.xlu0 %v969, 32
    %v972 = vpop.permute.xlu0 %971
    %v974 = vadd.f32 %v964, %v972
    %v975 = vtanh.pop %v974
    %977 = vrot.lane.b32.xlu0 %v975, 64
    %v978 = vpop.permute.xlu0 %977
    %v980 = vmul.f32 %v963, %v978
    %982 = vrot.lane.b32.xlu0 %v980, 32
    %v983 = vpop.permute.xlu0 %982
    %985 = vst.msk [vmem:[#allocation7] sm:$0xff] %vm63, %v983
    // Predicated region
    $region22: #{tpu_custom_call.1} parent=1 // pred_check
      _
    $region23: #{tpu_custom_call.1} parent=1 // pred_check_branch
      %987 = sbr.rel (0) target = $region25
    $region24: #{tpu_custom_call.1} parent=1 // pred_region
      %989 = vsyncadd [#allocation4], 0
      %s991 = sshll.u32 [#allocation7], 4
      %s992 = int_to_ptr.vmem [resolvable:$true] %s991
      %s993 = sshll.u32 %s3, 4
      %s994 = int_to_ptr.hbm [resolvable:$true] %s993
      %996 = dma.vmem_to_hbm [thread:$0]  %s992, 128, %s994, [#allocation4]
    $region25: #{tpu_custom_call.1} parent=1 // pred_fallthru
      _
    // Predicated region
    $region26: #{tpu_custom_call.1} parent=1 // pred_check
      _
    $region27: #{tpu_custom_call.1} parent=1 // pred_check_branch
      %998 = sbr.rel (0) target = $region29
    $region28: #{tpu_custom_call.1} parent=1 // pred_region
      %1000 = dma.done [#allocation4], 128
    $region29: #{tpu_custom_call.1} parent=1 // pred_fallthru
      _
    %1001 = vsyncpa [#allocation3], 1
    %1002 = vsyncpa [#allocation6], 1
    %1003 = vsyncpa [#allocation4], 1

</llo_original>
